<compile_context>
chip_gen: v6e
topology: v6e:2x2x1
jax: 0.10.0
libtpu: 0.0.40
codegen_flags: <defaults>
</compile_context>

<pallas_src>
import jax
import jax.numpy as jnp
from jax.experimental import pallas as pl
from jax.experimental.pallas import tpu as pltpu


def _round_up(x, m):
    return (x + m - 1) // m * m


def dqn_kernel(x_ref,
               w1_ref, b1_ref,
               w2_ref, b2_ref,
               w3_ref, b3_ref,
               w4_ref, b4_ref,
               o_ref):
    # x arrives as f32 (no wrapper-side cast); cast to bf16 at the MXU input,
    # accumulate in f32, add bias + ReLU in f32, and emit hidden activations
    # directly as bf16 so any compiler spills are half-width.
    x = x_ref[...].astype(jnp.bfloat16)

    # layer 1: Linear(n_state, 243) + ReLU   (K unpadded, N padded to 256)
    h1 = jnp.maximum(
        jnp.dot(x, w1_ref[...], preferred_element_type=jnp.float32) + b1_ref[...],
        0.0).astype(jnp.bfloat16)

    # layer 2: Linear(243, 393) + ReLU       (padded to 256 x 512)
    h2 = jnp.maximum(
        jnp.dot(h1, w2_ref[...], preferred_element_type=jnp.float32) + b2_ref[...],
        0.0).astype(jnp.bfloat16)

    # layer 3: Linear(393, 635) + ReLU       (padded to 512 x 640)
    h3 = jnp.maximum(
        jnp.dot(h2, w3_ref[...], preferred_element_type=jnp.float32) + b3_ref[...],
        0.0).astype(jnp.bfloat16)

    # output layer: Linear(635, n_action), no activation (padded to 640 x 128)
    out = jnp.dot(h3, w4_ref[...], preferred_element_type=jnp.float32) + b4_ref[...]
    o_ref[...] = out.astype(o_ref.dtype)


def prepare_params(params):
    """One-time prep (amortized across forward calls): zero-pad layer widths to
    lane-dense multiples of 128 and cast weights to bf16 (biases stay f32).
    Layer 1 keeps K = n_state unpadded so x can be passed unpadded.  Zero
    padding keeps numerics identical: padded lanes stay exactly 0 through
    bias/ReLU and multiply against zero weight rows."""
    padded = []
    for li, (w, b) in enumerate(params):
        d_in, d_out = w.shape
        pi = d_in if li == 0 else _round_up(d_in, 128)
        po = _round_up(d_out, 128)
        w_p = jnp.zeros((pi, po), jnp.bfloat16).at[:d_in, :d_out].set(
            w.astype(jnp.bfloat16))
        b_p = jnp.zeros((1, po), jnp.float32).at[0, :d_out].set(
            b.astype(jnp.float32))
        padded.append((w_p, b_p))
    meta = {
        "n_state": params[0][0].shape[0],
        "n_action": params[-1][0].shape[1],
        "d_out_pad": padded[-1][0].shape[1],
    }
    return padded, meta


def _pick_batch_tile(batch):
    # Generation-portable batch tile:
    #  * batch <= 16: one small tile (x/out tiles are f32 -> 8-row granularity).
    #  * 16 < batch <= 256: >= 2 grid steps so v7x's 2nd TensorCore gets work.
    #  * batch > 256: 256-row tiles fill the 256-wide MXU on v6e/v7x and keep
    #    the ~0.35us/step pipeline overhead small vs per-step compute, while
    #    fitting comfortably in v7x's 64 MiB VMEM with single-buffered weights.
    if batch <= 16:
        return _round_up(batch, 8)
    if batch <= 256:
        return _round_up(pl.cdiv(batch, 2), 16)
    return 256


def dqn_forward(x, prepared):
    """x: (batch, n_state) float32. prepared: output of prepare_params."""
    padded_params, meta = prepared
    (w1, b1), (w2, b2), (w3, b3), (w4, b4) = padded_params

    batch, n_state = x.shape
    assert n_state == meta["n_state"]
    d4 = meta["d_out_pad"]
    n_action = meta["n_action"]

    tb = _pick_batch_tile(batch)
    b_pad = _round_up(batch, tb)
    # No per-call lane pad / dtype cast of x.  Only add tail rows when batch
    # does not divide the tile; typical power-of-two batches skip this.
    x_in = x if b_pad == batch else jnp.pad(x, ((0, b_pad - batch), (0, 0)))

    def weight_spec(shape):
        # Constant index_map: block never changes across the batch grid, so a
        # single VMEM buffer suffices (default double-buffer is pure waste).
        return pl.BlockSpec(shape, lambda i: (0, 0),
                            pipeline_mode=pl.Buffered(buffer_count=1))

    out_p = pl.pallas_call(
        dqn_kernel,
        out_shape=jax.ShapeDtypeStruct((b_pad, d4), jnp.float32),
        grid_spec=pltpu.PrefetchScalarGridSpec(
            num_scalar_prefetch=0,
            grid=(b_pad // tb,),
            in_specs=[
                # x: unpadded last dim (= full array dim -> tile legal).
                pl.BlockSpec((tb, n_state), lambda i: (i, 0)),
                weight_spec(w1.shape), weight_spec(b1.shape),
                weight_spec(w2.shape), weight_spec(b2.shape),
                weight_spec(w3.shape), weight_spec(b3.shape),
                weight_spec(w4.shape), weight_spec(b4.shape),
            ],
            out_specs=pl.BlockSpec((tb, d4), lambda i: (i, 0)),
        ),
        compiler_params=pltpu.CompilerParams(
            dimension_semantics=("parallel",),
            # ~1.1 MiB single-buffered weights + double-buffered x/out tiles +
            # intermediates: well under 32 MiB; safe on v7x's 64 MiB VMEM.
            vmem_limit_bytes=32 << 20,
        ),
    )(x_in, w1, b1, w2, b2, w3, b3, w4, b4)

    return out_p[:batch, :n_action]


def init_linear(key, in_features, out_features):
    """PyTorch nn.Linear default init: U(-1/sqrt(in), 1/sqrt(in)).
    Returns W as (in_features, out_features) so y = x @ W + b."""
    kw, kb = jax.random.split(key)
    bound = 1.0 / jnp.sqrt(jnp.float32(in_features))
    w = jax.random.uniform(kw, (in_features, out_features), jnp.float32,
                           minval=-bound, maxval=bound)
    b = jax.random.uniform(kb, (out_features,), jnp.float32,
                           minval=-bound, maxval=bound)
    return w, b


def reference_forward_f32(x, params):
    h = x
    for i, (w, b) in enumerate(params):
        h = h @ w + b
        if i < len(params) - 1:
            h = jnp.maximum(h, 0.0)
    return h


def reference_forward_bf16(x, params):
    """Same math as the kernel: bf16 matmul inputs, f32 accumulation/bias/ReLU."""
    h = x.astype(jnp.bfloat16)
    for i, (w, b) in enumerate(params):
        h = jnp.dot(h, w.astype(jnp.bfloat16),
                    preferred_element_type=jnp.float32) + b.astype(jnp.float32)
        if i < len(params) - 1:
            h = jnp.maximum(h, 0.0).astype(jnp.bfloat16)
    return h


if __name__ == "__main__":
    n_state = 32     # small n_state
    n_action = 4     # small n_action
    batch = 8

    key = jax.random.PRNGKey(0)
    k_x, k1, k2, k3, k4 = jax.random.split(key, 5)

    x = jax.random.normal(k_x, (batch, n_state), jnp.float32)

    params = [
        init_linear(k1, n_state, 243),
        init_linear(k2, 243, 393),
        init_linear(k3, 393, 635),
        init_linear(k4, 635, n_action),
    ]

    prepared = prepare_params(params)

    out = dqn_forward(x, prepared)
    out = jax.block_until_ready(out)

    ref_bf16 = reference_forward_bf16(x, params)   # same precision recipe as kernel
    ref_f32 = reference_forward_f32(x, params)     # full-precision sanity check

    assert out.shape == (batch, n_action), out.shape
    assert jnp.allclose(out, ref_bf16, atol=2e-3, rtol=2e-3), \
        float(jnp.max(jnp.abs(out - ref_bf16)))
    assert jnp.allclose(out, ref_f32, atol=5e-2, rtol=5e-2), \
        float(jnp.max(jnp.abs(out - ref_f32)))

    print("KERNEL_OK")
</pallas_src>

<mosaic_0001>
module attributes {stable_mosaic.version = 11 : i64} {
  func.func @dqn_kernel(%arg0: i32, %arg1: memref<8x32xf32, #tpu.memory_space<vmem>>, %arg2: memref<32x256xbf16, #tpu.memory_space<vmem>>, %arg3: memref<1x256xf32, #tpu.memory_space<vmem>>, %arg4: memref<256x512xbf16, #tpu.memory_space<vmem>>, %arg5: memref<1x512xf32, #tpu.memory_space<vmem>>, %arg6: memref<512x640xbf16, #tpu.memory_space<vmem>>, %arg7: memref<1x640xf32, #tpu.memory_space<vmem>>, %arg8: memref<640x128xbf16, #tpu.memory_space<vmem>>, %arg9: memref<1x128xf32, #tpu.memory_space<vmem>>, %arg10: memref<8x128xf32, #tpu.memory_space<vmem>>) attributes {dimension_semantics = [#tpu.dimension_semantics<parallel>], iteration_bounds = array<i64: 1>, scalar_prefetch = 0 : i64, scratch_operands = 0 : i64, tpu.core_type = #tpu.core_type<tc>, window_params = [{transform_indices = @transform_0, window_bounds = array<i64: 8, 32>}, {pipeline_mode = #tpu.pipeline_mode<synchronous>, transform_indices = @transform_1, window_bounds = array<i64: 32, 256>}, {pipeline_mode = #tpu.pipeline_mode<synchronous>, transform_indices = @transform_2, window_bounds = array<i64: 1, 256>}, {pipeline_mode = #tpu.pipeline_mode<synchronous>, transform_indices = @transform_3, window_bounds = array<i64: 256, 512>}, {pipeline_mode = #tpu.pipeline_mode<synchronous>, transform_indices = @transform_4, window_bounds = array<i64: 1, 512>}, {pipeline_mode = #tpu.pipeline_mode<synchronous>, transform_indices = @transform_5, window_bounds = array<i64: 512, 640>}, {pipeline_mode = #tpu.pipeline_mode<synchronous>, transform_indices = @transform_6, window_bounds = array<i64: 1, 640>}, {pipeline_mode = #tpu.pipeline_mode<synchronous>, transform_indices = @transform_7, window_bounds = array<i64: 640, 128>}, {pipeline_mode = #tpu.pipeline_mode<synchronous>, transform_indices = @transform_8, window_bounds = array<i64: 1, 128>}, {transform_indices = @transform_9, window_bounds = array<i64: 8, 128>}]} {
    %c0 = arith.constant 0 : index
    %c0_0 = arith.constant 0 : index
    %0 = vector.load %arg1[%c0, %c0_0] : memref<8x32xf32, #tpu.memory_space<vmem>>, vector<8x32xf32>
    %1 = arith.truncf %0 : vector<8x32xf32> to vector<8x32xbf16>
    %c0_1 = arith.constant 0 : index
    %c0_2 = arith.constant 0 : index
    %2 = vector.load %arg2[%c0_1, %c0_2] : memref<32x256xbf16, #tpu.memory_space<vmem>>, vector<32x256xbf16>
    %cst = arith.constant dense<0.000000e+00> : vector<8x256xf32>
    %3 = tpu.matmul %1, %2, %cst {dimension_numbers = #tpu.dot_dimension_numbers<[1], [0], [0], [1], [0, 0, 1, 1], [], []>} : vector<8x32xbf16>, vector<32x256xbf16>, vector<8x256xf32> -> vector<8x256xf32>
    %c0_3 = arith.constant 0 : index
    %c0_4 = arith.constant 0 : index
    %4 = vector.load %arg3[%c0_3, %c0_4] : memref<1x256xf32, #tpu.memory_space<vmem>>, vector<1x256xf32>
    %5 = vector.broadcast %4 : vector<1x256xf32> to vector<8x256xf32>
    %6 = arith.addf %3, %5 : vector<8x256xf32>
    %cst_5 = arith.constant 0.000000e+00 : f32
    %7 = vector.broadcast %cst_5 : f32 to vector<8x256xf32>
    %8 = arith.maximumf %6, %7 : vector<8x256xf32>
    %9 = arith.truncf %8 : vector<8x256xf32> to vector<8x256xbf16>
    %c0_6 = arith.constant 0 : index
    %c0_7 = arith.constant 0 : index
    %10 = vector.load %arg4[%c0_6, %c0_7] : memref<256x512xbf16, #tpu.memory_space<vmem>>, vector<256x512xbf16>
    %cst_8 = arith.constant dense<0.000000e+00> : vector<8x512xf32>
    %11 = tpu.matmul %9, %10, %cst_8 {dimension_numbers = #tpu.dot_dimension_numbers<[1], [0], [0], [1], [0, 0, 1, 1], [], []>} : vector<8x256xbf16>, vector<256x512xbf16>, vector<8x512xf32> -> vector<8x512xf32>
    %c0_9 = arith.constant 0 : index
    %c0_10 = arith.constant 0 : index
    %12 = vector.load %arg5[%c0_9, %c0_10] : memref<1x512xf32, #tpu.memory_space<vmem>>, vector<1x512xf32>
    %13 = vector.broadcast %12 : vector<1x512xf32> to vector<8x512xf32>
    %14 = arith.addf %11, %13 : vector<8x512xf32>
    %cst_11 = arith.constant 0.000000e+00 : f32
    %15 = vector.broadcast %cst_11 : f32 to vector<8x512xf32>
    %16 = arith.maximumf %14, %15 : vector<8x512xf32>
    %17 = arith.truncf %16 : vector<8x512xf32> to vector<8x512xbf16>
    %c0_12 = arith.constant 0 : index
    %c0_13 = arith.constant 0 : index
    %18 = vector.load %arg6[%c0_12, %c0_13] : memref<512x640xbf16, #tpu.memory_space<vmem>>, vector<512x640xbf16>
    %cst_14 = arith.constant dense<0.000000e+00> : vector<8x640xf32>
    %19 = tpu.matmul %17, %18, %cst_14 {dimension_numbers = #tpu.dot_dimension_numbers<[1], [0], [0], [1], [0, 0, 1, 1], [], []>} : vector<8x512xbf16>, vector<512x640xbf16>, vector<8x640xf32> -> vector<8x640xf32>
    %c0_15 = arith.constant 0 : index
    %c0_16 = arith.constant 0 : index
    %20 = vector.load %arg7[%c0_15, %c0_16] : memref<1x640xf32, #tpu.memory_space<vmem>>, vector<1x640xf32>
    %21 = vector.broadcast %20 : vector<1x640xf32> to vector<8x640xf32>
    %22 = arith.addf %19, %21 : vector<8x640xf32>
    %cst_17 = arith.constant 0.000000e+00 : f32
    %23 = vector.broadcast %cst_17 : f32 to vector<8x640xf32>
    %24 = arith.maximumf %22, %23 : vector<8x640xf32>
    %25 = arith.truncf %24 : vector<8x640xf32> to vector<8x640xbf16>
    %c0_18 = arith.constant 0 : index
    %c0_19 = arith.constant 0 : index
    %26 = vector.load %arg8[%c0_18, %c0_19] : memref<640x128xbf16, #tpu.memory_space<vmem>>, vector<640x128xbf16>
    %cst_20 = arith.constant dense<0.000000e+00> : vector<8x128xf32>
    %27 = tpu.matmul %25, %26, %cst_20 {dimension_numbers = #tpu.dot_dimension_numbers<[1], [0], [0], [1], [0, 0, 1, 1], [], []>} : vector<8x640xbf16>, vector<640x128xbf16>, vector<8x128xf32> -> vector<8x128xf32>
    %c0_21 = arith.constant 0 : index
    %c0_22 = arith.constant 0 : index
    %28 = vector.load %arg9[%c0_21, %c0_22] : memref<1x128xf32, #tpu.memory_space<vmem>>, vector<1x128xf32>
    %29 = vector.broadcast %28 : vector<1x128xf32> to vector<8x128xf32>
    %30 = arith.addf %27, %29 : vector<8x128xf32>
    %c0_23 = arith.constant 0 : index
    %c0_24 = arith.constant 0 : index
    %31 = vector.load %arg10[%c0_23, %c0_24] : memref<8x128xf32, #tpu.memory_space<vmem>>, vector<8x128xf32>
    tpu.vector_store %arg10[%c0_23, %c0_24], %30 {strides = array<i32>} : memref<8x128xf32, #tpu.memory_space<vmem>>, vector<8x128xf32>,
    return
  }
  func.func @transform_0(%arg0: i32) -> (i32, i32) {
    %c0_i32 = arith.constant 0 : i32
    %c0_i32_0 = arith.constant 0 : i32
    return %arg0, %c0_i32 : i32, i32
  }
  func.func @transform_1(%arg0: i32) -> (i32, i32) {
    %c0_i32 = arith.constant 0 : i32
    %c0_i32_0 = arith.constant 0 : i32
    %c0_i32_1 = arith.constant 0 : i32
    return %c0_i32, %c0_i32_0 : i32, i32
  }
  func.func @transform_2(%arg0: i32) -> (i32, i32) {
    %c0_i32 = arith.constant 0 : i32
    %c0_i32_0 = arith.constant 0 : i32
    %c0_i32_1 = arith.constant 0 : i32
    return %c0_i32, %c0_i32_0 : i32, i32
  }
  func.func @transform_3(%arg0: i32) -> (i32, i32) {
    %c0_i32 = arith.constant 0 : i32
    %c0_i32_0 = arith.constant 0 : i32
    %c0_i32_1 = arith.constant 0 : i32
    return %c0_i32, %c0_i32_0 : i32, i32
  }
  func.func @transform_4(%arg0: i32) -> (i32, i32) {
    %c0_i32 = arith.constant 0 : i32
    %c0_i32_0 = arith.constant 0 : i32
    %c0_i32_1 = arith.constant 0 : i32
    return %c0_i32, %c0_i32_0 : i32, i32
  }
  func.func @transform_5(%arg0: i32) -> (i32, i32) {
    %c0_i32 = arith.constant 0 : i32
    %c0_i32_0 = arith.constant 0 : i32
    %c0_i32_1 = arith.constant 0 : i32
    return %c0_i32, %c0_i32_0 : i32, i32
  }
  func.func @transform_6(%arg0: i32) -> (i32, i32) {
    %c0_i32 = arith.constant 0 : i32
    %c0_i32_0 = arith.constant 0 : i32
    %c0_i32_1 = arith.constant 0 : i32
    return %c0_i32, %c0_i32_0 : i32, i32
  }
  func.func @transform_7(%arg0: i32) -> (i32, i32) {
    %c0_i32 = arith.constant 0 : i32
    %c0_i32_0 = arith.constant 0 : i32
    %c0_i32_1 = arith.constant 0 : i32
    return %c0_i32, %c0_i32_0 : i32, i32
  }
  func.func @transform_8(%arg0: i32) -> (i32, i32) {
    %c0_i32 = arith.constant 0 : i32
    %c0_i32_0 = arith.constant 0 : i32
    %c0_i32_1 = arith.constant 0 : i32
    return %c0_i32, %c0_i32_0 : i32, i32
  }
  func.func @transform_9(%arg0: i32) -> (i32, i32) {
    %c0_i32 = arith.constant 0 : i32
    %c0_i32_0 = arith.constant 0 : i32
    return %arg0, %c0_i32 : i32, i32
  }
}

</mosaic_0001>

<llo_original>
// kernel: tpu_custom_call.1
$region0: #{tpu_custom_call.1}
  #allocation0 [shape = 'u32[]', space=smem, size = 0x4, offset = 0x4, fixed_abs, tag = 'smem constant byte address 0x4 - core index']
  #allocation1 [shape = 'u32[144,128]{1,0:T(1,128)}', space=vmem, size = 0x12000, scoped, tag = 'internal scratch']
  %s0 = inlined_call_operand.hbm [shape: f32[8,32], index: 0, kind: input, shape index: {}]
  %s1 = inlined_call_operand.hbm [shape: bf16[32,256], index: 1, kind: input, shape index: {}]
  %s2 = inlined_call_operand.hbm [shape: f32[1,256], index: 2, kind: input, shape index: {}]
  %s3 = inlined_call_operand.hbm [shape: bf16[256,512], index: 3, kind: input, shape index: {}]
  %s4 = inlined_call_operand.vmem [shape: f32[1,512], index: 4, kind: input, shape index: {}]
  %s5 = inlined_call_operand.hbm [shape: bf16[512,640], index: 5, kind: input, shape index: {}]
  %s6 = inlined_call_operand.vmem [shape: f32[1,640], index: 6, kind: input, shape index: {}]
  %s7 = inlined_call_operand.hbm [shape: bf16[640,128], index: 7, kind: input, shape index: {}]
  %s8 = inlined_call_operand.vmem [shape: f32[1,128], index: 8, kind: input, shape index: {}]
  %s9 = inlined_call_operand.hbm [shape: f32[8,128], index: 9, kind: output, shape index: {}]
  %s10 = sld [smem:[#allocation0]]
  $region70: #{tpu_custom_call.1} parent=0
    _
  %s12 = ssub.s32 1, %s10
  %s13 = scalar_select 0, %s12, %s10
  $region1: #{tpu_custom_call.1} parent=0
    #allocation2 [shape = 'u8[4096]{0}', space=vmem, size = 0x1000, scoped, tag = 'input window, operand 0, single buffered']
    #allocation3 [shape = 's32[1]{0}', space=sflag, size = 0x4, scoped, tag = 'scoped memory for tpu_custom_call.1']
    #allocation4 [shape = 's32[1]{0}', space=sflag, size = 0x4, scoped, tag = 'scoped memory for tpu_custom_call.1']
    #allocation5 [shape = 'u8[16384]{0}', space=vmem, size = 0x4000, scoped, tag = 'input window, operand 1, single buffered']
    #allocation6 [shape = 's32[1]{0}', space=sflag, size = 0x4, scoped, tag = 'scoped memory for tpu_custom_call.1']
    #allocation7 [shape = 'u8[1024]{0}', space=vmem, size = 0x400, scoped, tag = 'input window, operand 2, single buffered']
    #allocation8 [shape = 'u8[262144]{0}', space=vmem, size = 0x40000, scoped, tag = 'input window, operand 3, single buffered']
    #allocation9 [shape = 's32[1]{0}', space=sflag, size = 0x4, scoped, tag = 'scoped memory for tpu_custom_call.1']
    #allocation10 [shape = 'u8[655360]{0}', space=vmem, size = 0xa0000, scoped, tag = 'input window, operand 5, single buffered']
    #allocation11 [shape = 'u8[163840]{0}', space=vmem, size = 0x28000, scoped, tag = 'input window, operand 7, single buffered']
    #allocation12 [shape = 's32[1]{0}', space=sflag, size = 0x4, scoped, tag = 'scoped memory for tpu_custom_call.1']
    #allocation13 [shape = 'u8[4096]{0}', space=vmem, size = 0x1000, scoped, tag = 'output window, operand 0, single buffered']
    %14 = vsyncpa [#allocation3], 0
    %15 = vsyncpa [#allocation6], 0
    %16 = vsyncpa [#allocation9], 0
    %17 = vsyncpa [#allocation12], 0
    %18 = vsyncpa [#allocation4], 0
    // Predicated region
    $region2: #{tpu_custom_call.1} parent=1 // pred_check
      _
    $region3: #{tpu_custom_call.1} parent=1 // pred_check_branch
      %20 = sbr.rel (0) target = $region5
    $region4: #{tpu_custom_call.1} parent=1 // pred_region
      %s22 = ssub.s32 128, 128
      %23 = vsyncadd [#allocation3], %s22
      %s25 = sshll.u32 [#allocation2], 4
      %s26 = int_to_ptr.vmem [resolvable:$true] %s25
      %28 = dma.hbm_to_vmem [thread:$0]  %s0, 128, %s26, [#allocation3]
    $region5: #{tpu_custom_call.1} parent=1 // pred_fallthru
      _
    // Predicated region
    $region6: #{tpu_custom_call.1} parent=1 // pred_check
      _
    $region7: #{tpu_custom_call.1} parent=1 // pred_check_branch
      %30 = sbr.rel (0) target = $region9
    $region8: #{tpu_custom_call.1} parent=1 // pred_region
      %s32 = ssub.s32 512, 512
      %33 = vsyncadd [#allocation6], %s32
      %s34 = sshll.u32 [#allocation5], 4
      %s35 = int_to_ptr.vmem [resolvable:$true] %s34
      %40 = dma.hbm_to_vmem [thread:$0]  %s1, 512, %s35, [#allocation6], 128, 128, 8
    $region9: #{tpu_custom_call.1} parent=1 // pred_fallthru
      _
    // Predicated region
    $region10: #{tpu_custom_call.1} parent=1 // pred_check
      _
    $region11: #{tpu_custom_call.1} parent=1 // pred_check_branch
      %42 = sbr.rel (0) target = $region13
    $region12: #{tpu_custom_call.1} parent=1 // pred_region
      %s44 = ssub.s32 32, 32
      %45 = vsyncadd [#allocation6], %s44
      %s47 = sshll.u32 [#allocation7], 4
      %s48 = int_to_ptr.vmem [resolvable:$true] %s47
      %50 = dma.hbm_to_vmem [thread:$0]  %s2, 32, %s48, [#allocation6]
    $region13: #{tpu_custom_call.1} parent=1 // pred_fallthru
      _
    // Predicated region
    $region14: #{tpu_custom_call.1} parent=1 // pred_check
      _
    $region15: #{tpu_custom_call.1} parent=1 // pred_check_branch
      %52 = sbr.rel (0) target = $region17
    $region16: #{tpu_custom_call.1} parent=1 // pred_region
      %s54 = ssub.s32 8192, 8192
      %55 = vsyncadd [#allocation9], %s54
      %s56 = sshll.u32 [#allocation8], 4
      %s57 = int_to_ptr.vmem [resolvable:$true] %s56
      %62 = dma.hbm_to_vmem [thread:$0]  %s3, 8192, %s57, [#allocation9], 256, 256, 16
    $region17: #{tpu_custom_call.1} parent=1 // pred_fallthru
      _
    // Predicated region
    $region18: #{tpu_custom_call.1} parent=1 // pred_check
      _
    $region19: #{tpu_custom_call.1} parent=1 // pred_check_branch
      %64 = sbr.rel (0) target = $region21
    $region20: #{tpu_custom_call.1} parent=1 // pred_region
      _
    $region21: #{tpu_custom_call.1} parent=1 // pred_fallthru
      _
    // Predicated region
    $region22: #{tpu_custom_call.1} parent=1 // pred_check
      _
    $region23: #{tpu_custom_call.1} parent=1 // pred_check_branch
      %66 = sbr.rel (0) target = $region25
    $region24: #{tpu_custom_call.1} parent=1 // pred_region
      %s68 = ssub.s32 20480, 20480
      %69 = vsyncadd [#allocation9], %s68
      %s70 = sshll.u32 [#allocation10], 4
      %s71 = int_to_ptr.vmem [resolvable:$true] %s70
      %76 = dma.hbm_to_vmem [thread:$0]  %s5, 20480, %s71, [#allocation9], 320, 320, 20
    $region25: #{tpu_custom_call.1} parent=1 // pred_fallthru
      _
    // Predicated region
    $region26: #{tpu_custom_call.1} parent=1 // pred_check
      _
    $region27: #{tpu_custom_call.1} parent=1 // pred_check_branch
      %78 = sbr.rel (0) target = $region29
    $region28: #{tpu_custom_call.1} parent=1 // pred_region
      _
    $region29: #{tpu_custom_call.1} parent=1 // pred_fallthru
      _
    // Predicated region
    $region30: #{tpu_custom_call.1} parent=1 // pred_check
      _
    $region31: #{tpu_custom_call.1} parent=1 // pred_check_branch
      %80 = sbr.rel (0) target = $region33
    $region32: #{tpu_custom_call.1} parent=1 // pred_region
      %s82 = ssub.s32 5120, 5120
      %83 = vsyncadd [#allocation12], %s82
      %s84 = sshll.u32 [#allocation11], 4
      %s85 = int_to_ptr.vmem [resolvable:$true] %s84
      %90 = dma.hbm_to_vmem [thread:$0]  %s7, 5120, %s85, [#allocation12], 64, 64, 4
    $region33: #{tpu_custom_call.1} parent=1 // pred_fallthru
      _
    // Predicated region
    $region34: #{tpu_custom_call.1} parent=1 // pred_check
      _
    $region35: #{tpu_custom_call.1} parent=1 // pred_check_branch
      %92 = sbr.rel (0) target = $region37
    $region36: #{tpu_custom_call.1} parent=1 // pred_region
      _
    $region37: #{tpu_custom_call.1} parent=1 // pred_fallthru
      _
    // Predicated region
    $region38: #{tpu_custom_call.1} parent=1 // pred_check
      _
    $region39: #{tpu_custom_call.1} parent=1 // pred_check_branch
      %94 = sbr.rel (0) target = $region41
    $region40: #{tpu_custom_call.1} parent=1 // pred_region
      %95 = dma.done [#allocation3], 128
    $region41: #{tpu_custom_call.1} parent=1 // pred_fallthru
      _
    // Predicated region
    $region42: #{tpu_custom_call.1} parent=1 // pred_check
      _
    $region43: #{tpu_custom_call.1} parent=1 // pred_check_branch
      %97 = sbr.rel (0) target = $region45
    $region44: #{tpu_custom_call.1} parent=1 // pred_region
      %98 = dma.done [#allocation6], 512
    $region45: #{tpu_custom_call.1} parent=1 // pred_fallthru
      _
    // Predicated region
    $region46: #{tpu_custom_call.1} parent=1 // pred_check
      _
    $region47: #{tpu_custom_call.1} parent=1 // pred_check_branch
      %100 = sbr.rel (0) target = $region49
    $region48: #{tpu_custom_call.1} parent=1 // pred_region
      %101 = dma.done [#allocation6], 32
    $region49: #{tpu_custom_call.1} parent=1 // pred_fallthru
      _
    // Predicated region
    $region50: #{tpu_custom_call.1} parent=1 // pred_check
      _
    $region51: #{tpu_custom_call.1} parent=1 // pred_check_branch
      %103 = sbr.rel (0) target = $region53
    $region52: #{tpu_custom_call.1} parent=1 // pred_region
      %104 = dma.done [#allocation9], 8192
    $region53: #{tpu_custom_call.1} parent=1 // pred_fallthru
      _
    // Predicated region
    $region54: #{tpu_custom_call.1} parent=1 // pred_check
      _
    $region55: #{tpu_custom_call.1} parent=1 // pred_check_branch
      %106 = sbr.rel (0) target = $region57
    $region56: #{tpu_custom_call.1} parent=1 // pred_region
      %107 = dma.done [#allocation9], 20480
    $region57: #{tpu_custom_call.1} parent=1 // pred_fallthru
      _
    // Predicated region
    $region58: #{tpu_custom_call.1} parent=1 // pred_check
      _
    $region59: #{tpu_custom_call.1} parent=1 // pred_check_branch
      %109 = sbr.rel (0) target = $region61
    $region60: #{tpu_custom_call.1} parent=1 // pred_region
      %110 = dma.done [#allocation12], 5120
    $region61: #{tpu_custom_call.1} parent=1 // pred_fallthru
      _
    %v112 = vld [vmem:[#allocation2] sm:$0xff]
    %v113 = vpack.c.bf16 %v112, %v112
    %v114 = vld [vmem:[#allocation5] sm:$0xff]
    %v115 = vld [vmem:[#allocation5 + $0x8] sm:$0xff]
    %v116 = vld [vmem:[#allocation5 + $0x10] sm:$0xff]
    %v117 = vld [vmem:[#allocation5 + $0x18] sm:$0xff]
    %v118 = vld [vmem:[#allocation7] sm:$0x3]
    %v120 = vlaneseq
    %v121 = vshrl.u32 %v120, 7
    %v122 = vsub.s32 0, %v121
    %v123 = vrot.slane %v118, %v122
    %v124 = vlaneseq
    %v125 = vshrl.u32 %v124, 7
    %v126 = vsub.s32 1, %v125
    %v127 = vrot.slane %v118, %v126
    %v134 = vunpack.c.l.b16 %v114
    %v135 = vunpack.c.h.b16 %v114
    %v136 = vunpack.c.l.b16 %v115
    %v137 = vunpack.c.h.b16 %v115
    %v138 = vunpack.c.l.b16 %v116
    %v139 = vunpack.c.h.b16 %v116
    %v140 = vunpack.c.l.b16 %v117
    %v141 = vunpack.c.h.b16 %v117
    %v142 = vpack.c.b16 %v136, %v134
    %v143 = vpack.c.b16 %v137, %v135
    %v144 = vpack.c.b16 %v140, %v138
    %v145 = vpack.c.b16 %v141, %v139
    %vm150 = vcmask 261120
    %v152 = vsel %vm150, %v113, 0
    %154 = vmatprep.subr.bf16.mxu0 0
    %155 = vmatpush1.bf16.msra.mxu0 0
    %156 = vmatprep.subr.bf16.mxu0 0
    %157 = vmatpush1.bf16.msra.mxu0 0
    %158 = vmatprep.subr.bf16.mxu0 0
    %159 = vmatpush1.bf16.msra.mxu0 0
    %160 = vmatprep.subr.bf16.mxu0 0
    %161 = vmatpush1.bf16.msra.mxu0 0
    %162 = vmatprep.subr.bf16.mxu0 0
    %163 = vmatpush1.bf16.msra.mxu0 0
    %164 = vmatprep.subr.bf16.mxu0 0
    %165 = vmatpush1.bf16.msra.mxu0 0
    %166 = vmatprep.subr.bf16.mxu0 %v145
    %167 = vmatpush1.bf16.msra.mxu0 %v144
    %168 = vmatprep.subr.bf16.mxu0 %v143
    %169 = vmatpush1.bf16.msra.mxu0 %v142
    %170 = vmatprep.subr.bf16.mxu0 0
    %171 = vmatpush2.bf16.msra.mxu0 0
    %172 = vmatprep.subr.bf16.mxu0 0
    %173 = vmatpush2.bf16.msra.mxu0 0
    %174 = vmatprep.subr.bf16.mxu0 0
    %175 = vmatpush2.bf16.msra.mxu0 0
    %176 = vmatprep.subr.bf16.mxu0 0
    %177 = vmatpush2.bf16.msra.mxu0 0
    %178 = vmatprep.subr.bf16.mxu0 0
    %179 = vmatpush2.bf16.msra.mxu0 0
    %180 = vmatprep.subr.bf16.mxu0 0
    %181 = vmatpush2.bf16.msra.mxu0 0
    %182 = vmatprep.subr.bf16.mxu0 0
    %183 = vmatpush2.bf16.msra.mxu0 0
    %184 = vmatprep.subr.bf16.mxu0 0
    %185 = vmatpush2.bf16.msra.mxu0 0
    %186 = vmatprep.mubr.bf16.mxu0 0
    %187 = vmatmul.mubr.bf16.gmra.mxu0 %v152
    %v188 = vpop.f32.mrf.mxu0
    %v189 = vadd.f32 %v123, %v188
    %v190 = vpop.f32.mrf.mxu0
    %v191 = vadd.f32 %v127, %v190
    %v192 = vpop.f32.mrf.mxu0
    %v193 = vpop.f32.mrf.mxu0
    %194 = vdwg.mxu0
    %v195 = vmax.f32 %v189, 0.0
    %v196 = vmax.f32 %v191, 0.0
    %v197 = vpack.c.bf16 %v195, %v195
    %v198 = vpack.c.bf16 %v196, %v196
    %v199 = vld [vmem:[#allocation8] sm:$0xff]
    %v200 = vld [vmem:[#allocation8 + $0x8] sm:$0xff]
    %v201 = vld [vmem:[#allocation8 + $0x10] sm:$0xff]
    %v202 = vld [vmem:[#allocation8 + $0x18] sm:$0xff]
    %v203 = vld [vmem:[#allocation8 + $0x20] sm:$0xff]
    %v204 = vld [vmem:[#allocation8 + $0x28] sm:$0xff]
    %v205 = vld [vmem:[#allocation8 + $0x30] sm:$0xff]
    %v206 = vld [vmem:[#allocation8 + $0x38] sm:$0xff]
    %v207 = vld [vmem:[#allocation8 + $0x40] sm:$0xff]
    %v208 = vld [vmem:[#allocation8 + $0x48] sm:$0xff]
    %v209 = vld [vmem:[#allocation8 + $0x50] sm:$0xff]
    %v210 = vld [vmem:[#allocation8 + $0x58] sm:$0xff]
    %v211 = vld [vmem:[#allocation8 + $0x60] sm:$0xff]
    %v212 = vld [vmem:[#allocation8 + $0x68] sm:$0xff]
    %v213 = vld [vmem:[#allocation8 + $0x70] sm:$0xff]
    %v214 = vld [vmem:[#allocation8 + $0x78] sm:$0xff]
    %v215 = vld [vmem:[#allocation8 + $0x80] sm:$0xff]
    %v216 = vld [vmem:[#allocation8 + $0x88] sm:$0xff]
    %v217 = vld [vmem:[#allocation8 + $0x90] sm:$0xff]
    %v218 = vld [vmem:[#allocation8 + $0x98] sm:$0xff]
    %v219 = vld [vmem:[#allocation8 + $0xa0] sm:$0xff]
    %v220 = vld [vmem:[#allocation8 + $0xa8] sm:$0xff]
    %v221 = vld [vmem:[#allocation8 + $0xb0] sm:$0xff]
    %v222 = vld [vmem:[#allocation8 + $0xb8] sm:$0xff]
    %v223 = vld [vmem:[#allocation8 + $0xc0] sm:$0xff]
    %v224 = vld [vmem:[#allocation8 + $0xc8] sm:$0xff]
    %v225 = vld [vmem:[#allocation8 + $0xd0] sm:$0xff]
    %v226 = vld [vmem:[#allocation8 + $0xd8] sm:$0xff]
    %v227 = vld [vmem:[#allocation8 + $0xe0] sm:$0xff]
    %v228 = vld [vmem:[#allocation8 + $0xe8] sm:$0xff]
    %v229 = vld [vmem:[#allocation8 + $0xf0] sm:$0xff]
    %v230 = vld [vmem:[#allocation8 + $0xf8] sm:$0xff]
    %v231 = vld [vmem:[#allocation8 + $0x100] sm:$0xff]
    %v232 = vld [vmem:[#allocation8 + $0x108] sm:$0xff]
    %v233 = vld [vmem:[#allocation8 + $0x110] sm:$0xff]
    %v234 = vld [vmem:[#allocation8 + $0x118] sm:$0xff]
    %v235 = vld [vmem:[#allocation8 + $0x120] sm:$0xff]
    %v236 = vld [vmem:[#allocation8 + $0x128] sm:$0xff]
    %v237 = vld [vmem:[#allocation8 + $0x130] sm:$0xff]
    %v238 = vld [vmem:[#allocation8 + $0x138] sm:$0xff]
    %v239 = vld [vmem:[#allocation8 + $0x140] sm:$0xff]
    %v240 = vld [vmem:[#allocation8 + $0x148] sm:$0xff]
    %v241 = vld [vmem:[#allocation8 + $0x150] sm:$0xff]
    %v242 = vld [vmem:[#allocation8 + $0x158] sm:$0xff]
    %v243 = vld [vmem:[#allocation8 + $0x160] sm:$0xff]
    %v244 = vld [vmem:[#allocation8 + $0x168] sm:$0xff]
    %v245 = vld [vmem:[#allocation8 + $0x170] sm:$0xff]
    %v246 = vld [vmem:[#allocation8 + $0x178] sm:$0xff]
    %v247 = vld [vmem:[#allocation8 + $0x180] sm:$0xff]
    %v248 = vld [vmem:[#allocation8 + $0x188] sm:$0xff]
    %v249 = vld [vmem:[#allocation8 + $0x190] sm:$0xff]
    %v250 = vld [vmem:[#allocation8 + $0x198] sm:$0xff]
    %v251 = vld [vmem:[#allocation8 + $0x1a0] sm:$0xff]
    %v252 = vld [vmem:[#allocation8 + $0x1a8] sm:$0xff]
    %v253 = vld [vmem:[#allocation8 + $0x1b0] sm:$0xff]
    %v254 = vld [vmem:[#allocation8 + $0x1b8] sm:$0xff]
    %v255 = vld [vmem:[#allocation8 + $0x1c0] sm:$0xff]
    %v256 = vld [vmem:[#allocation8 + $0x1c8] sm:$0xff]
    %v257 = vld [vmem:[#allocation8 + $0x1d0] sm:$0xff]
    %v258 = vld [vmem:[#allocation8 + $0x1d8] sm:$0xff]
    %v259 = vld [vmem:[#allocation8 + $0x1e0] sm:$0xff]
    %v260 = vld [vmem:[#allocation8 + $0x1e8] sm:$0xff]
    %v261 = vld [vmem:[#allocation8 + $0x1f0] sm:$0xff]
    %v262 = vld [vmem:[#allocation8 + $0x1f8] sm:$0xff]
    %v263 = vld [vmem:[%s4] sm:$0xf]
    %v265 = vlaneseq
    %v266 = vshrl.u32 %v265, 7
    %v267 = vsub.s32 0, %v266
    %v268 = vrot.slane %v263, %v267
    %v269 = vlaneseq
    %v270 = vshrl.u32 %v269, 7
    %v271 = vsub.s32 1, %v270
    %v272 = vrot.slane %v263, %v271
    %v273 = vlaneseq
    %v274 = vshrl.u32 %v273, 7
    %v275 = vsub.s32 2, %v274
    %v276 = vrot.slane %v263, %v275
    %v277 = vlaneseq
    %v278 = vshrl.u32 %v277, 7
    %v279 = vsub.s32 3, %v278
    %v280 = vrot.slane %v263, %v279
    %v349 = vunpack.c.l.b16 %v199
    %v350 = vunpack.c.h.b16 %v199
    %v351 = vunpack.c.l.b16 %v200
    %v352 = vunpack.c.h.b16 %v200
    %v353 = vunpack.c.l.b16 %v201
    %v354 = vunpack.c.h.b16 %v201
    %v355 = vunpack.c.l.b16 %v202
    %v356 = vunpack.c.h.b16 %v202
    %v357 = vunpack.c.l.b16 %v203
    %v358 = vunpack.c.h.b16 %v203
    %v359 = vunpack.c.l.b16 %v204
    %v360 = vunpack.c.h.b16 %v204
    %v361 = vunpack.c.l.b16 %v205
    %v362 = vunpack.c.h.b16 %v205
    %v363 = vunpack.c.l.b16 %v206
    %v364 = vunpack.c.h.b16 %v206
    %v365 = vunpack.c.l.b16 %v207
    %v366 = vunpack.c.h.b16 %v207
    %v367 = vunpack.c.l.b16 %v208
    %v368 = vunpack.c.h.b16 %v208
    %v369 = vunpack.c.l.b16 %v209
    %v370 = vunpack.c.h.b16 %v209
    %v371 = vunpack.c.l.b16 %v210
    %v372 = vunpack.c.h.b16 %v210
    %v373 = vunpack.c.l.b16 %v211
    %v374 = vunpack.c.h.b16 %v211
    %v375 = vunpack.c.l.b16 %v212
    %v376 = vunpack.c.h.b16 %v212
    %v377 = vunpack.c.l.b16 %v213
    %v378 = vunpack.c.h.b16 %v213
    %v379 = vunpack.c.l.b16 %v214
    %v380 = vunpack.c.h.b16 %v214
    %v381 = vunpack.c.l.b16 %v215
    %v382 = vunpack.c.h.b16 %v215
    %v383 = vunpack.c.l.b16 %v216
    %v384 = vunpack.c.h.b16 %v216
    %v385 = vunpack.c.l.b16 %v217
    %v386 = vunpack.c.h.b16 %v217
    %v387 = vunpack.c.l.b16 %v218
    %v388 = vunpack.c.h.b16 %v218
    %v389 = vunpack.c.l.b16 %v219
    %v390 = vunpack.c.h.b16 %v219
    %v391 = vunpack.c.l.b16 %v220
    %v392 = vunpack.c.h.b16 %v220
    %v393 = vunpack.c.l.b16 %v221
    %v394 = vunpack.c.h.b16 %v221
    %v395 = vunpack.c.l.b16 %v222
    %v396 = vunpack.c.h.b16 %v222
    %v397 = vunpack.c.l.b16 %v223
    %v398 = vunpack.c.h.b16 %v223
    %v399 = vunpack.c.l.b16 %v224
    %v400 = vunpack.c.h.b16 %v224
    %v401 = vunpack.c.l.b16 %v225
    %v402 = vunpack.c.h.b16 %v225
    %v403 = vunpack.c.l.b16 %v226
    %v404 = vunpack.c.h.b16 %v226
    %v405 = vunpack.c.l.b16 %v227
    %v406 = vunpack.c.h.b16 %v227
    %v407 = vunpack.c.l.b16 %v228
    %v408 = vunpack.c.h.b16 %v228
    %v409 = vunpack.c.l.b16 %v229
    %v410 = vunpack.c.h.b16 %v229
    %v411 = vunpack.c.l.b16 %v230
    %v412 = vunpack.c.h.b16 %v230
    %v413 = vunpack.c.l.b16 %v231
    %v414 = vunpack.c.h.b16 %v231
    %v415 = vunpack.c.l.b16 %v232
    %v416 = vunpack.c.h.b16 %v232
    %v417 = vunpack.c.l.b16 %v233
    %v418 = vunpack.c.h.b16 %v233
    %v419 = vunpack.c.l.b16 %v234
    %v420 = vunpack.c.h.b16 %v234
    %v421 = vunpack.c.l.b16 %v235
    %v422 = vunpack.c.h.b16 %v235
    %v423 = vunpack.c.l.b16 %v236
    %v424 = vunpack.c.h.b16 %v236
    %v425 = vunpack.c.l.b16 %v237
    %v426 = vunpack.c.h.b16 %v237
    %v427 = vunpack.c.l.b16 %v238
    %v428 = vunpack.c.h.b16 %v238
    %v429 = vunpack.c.l.b16 %v239
    %v430 = vunpack.c.h.b16 %v239
    %v431 = vunpack.c.l.b16 %v240
    %v432 = vunpack.c.h.b16 %v240
    %v433 = vunpack.c.l.b16 %v241
    %v434 = vunpack.c.h.b16 %v241
    %v435 = vunpack.c.l.b16 %v242
    %v436 = vunpack.c.h.b16 %v242
    %v437 = vunpack.c.l.b16 %v243
    %v438 = vunpack.c.h.b16 %v243
    %v439 = vunpack.c.l.b16 %v244
    %v440 = vunpack.c.h.b16 %v244
    %v441 = vunpack.c.l.b16 %v245
    %v442 = vunpack.c.h.b16 %v245
    %v443 = vunpack.c.l.b16 %v246
    %v444 = vunpack.c.h.b16 %v246
    %v445 = vunpack.c.l.b16 %v247
    %v446 = vunpack.c.h.b16 %v247
    %v447 = vunpack.c.l.b16 %v248
    %v448 = vunpack.c.h.b16 %v248
    %v449 = vunpack.c.l.b16 %v249
    %v450 = vunpack.c.h.b16 %v249
    %v451 = vunpack.c.l.b16 %v250
    %v452 = vunpack.c.h.b16 %v250
    %v453 = vunpack.c.l.b16 %v251
    %v454 = vunpack.c.h.b16 %v251
    %v455 = vunpack.c.l.b16 %v252
    %v456 = vunpack.c.h.b16 %v252
    %v457 = vunpack.c.l.b16 %v253
    %v458 = vunpack.c.h.b16 %v253
    %v459 = vunpack.c.l.b16 %v254
    %v460 = vunpack.c.h.b16 %v254
    %v461 = vunpack.c.l.b16 %v255
    %v462 = vunpack.c.h.b16 %v255
    %v463 = vunpack.c.l.b16 %v256
    %v464 = vunpack.c.h.b16 %v256
    %v465 = vunpack.c.l.b16 %v257
    %v466 = vunpack.c.h.b16 %v257
    %v467 = vunpack.c.l.b16 %v258
    %v468 = vunpack.c.h.b16 %v258
    %v469 = vunpack.c.l.b16 %v259
    %v470 = vunpack.c.h.b16 %v259
    %v471 = vunpack.c.l.b16 %v260
    %v472 = vunpack.c.h.b16 %v260
    %v473 = vunpack.c.l.b16 %v261
    %v474 = vunpack.c.h.b16 %v261
    %v475 = vunpack.c.l.b16 %v262
    %v476 = vunpack.c.h.b16 %v262
    %v477 = vpack.c.b16 %v353, %v349
    %v478 = vpack.c.b16 %v354, %v350
    %v479 = vpack.c.b16 %v355, %v351
    %v480 = vpack.c.b16 %v356, %v352
    %v481 = vpack.c.b16 %v361, %v357
    %v482 = vpack.c.b16 %v362, %v358
    %v483 = vpack.c.b16 %v363, %v359
    %v484 = vpack.c.b16 %v364, %v360
    %v485 = vpack.c.b16 %v369, %v365
    %v486 = vpack.c.b16 %v370, %v366
    %v487 = vpack.c.b16 %v371, %v367
    %v488 = vpack.c.b16 %v372, %v368
    %v489 = vpack.c.b16 %v377, %v373
    %v490 = vpack.c.b16 %v378, %v374
    %v491 = vpack.c.b16 %v379, %v375
    %v492 = vpack.c.b16 %v380, %v376
    %v493 = vpack.c.b16 %v385, %v381
    %v494 = vpack.c.b16 %v386, %v382
    %v495 = vpack.c.b16 %v387, %v383
    %v496 = vpack.c.b16 %v388, %v384
    %v497 = vpack.c.b16 %v393, %v389
    %v498 = vpack.c.b16 %v394, %v390
    %v499 = vpack.c.b16 %v395, %v391
    %v500 = vpack.c.b16 %v396, %v392
    %v501 = vpack.c.b16 %v401, %v397
    %v502 = vpack.c.b16 %v402, %v398
    %v503 = vpack.c.b16 %v403, %v399
    %v504 = vpack.c.b16 %v404, %v400
    %v505 = vpack.c.b16 %v409, %v405
    %v506 = vpack.c.b16 %v410, %v406
    %v507 = vpack.c.b16 %v411, %v407
    %v508 = vpack.c.b16 %v412, %v408
    %v509 = vpack.c.b16 %v417, %v413
    %v510 = vpack.c.b16 %v418, %v414
    %v511 = vpack.c.b16 %v419, %v415
    %v512 = vpack.c.b16 %v420, %v416
    %v513 = vpack.c.b16 %v425, %v421
    %v514 = vpack.c.b16 %v426, %v422
    %v515 = vpack.c.b16 %v427, %v423
    %v516 = vpack.c.b16 %v428, %v424
    %v517 = vpack.c.b16 %v433, %v429
    %v518 = vpack.c.b16 %v434, %v430
    %v519 = vpack.c.b16 %v435, %v431
    %v520 = vpack.c.b16 %v436, %v432
    %v521 = vpack.c.b16 %v441, %v437
    %v522 = vpack.c.b16 %v442, %v438
    %v523 = vpack.c.b16 %v443, %v439
    %v524 = vpack.c.b16 %v444, %v440
    %v525 = vpack.c.b16 %v449, %v445
    %v526 = vpack.c.b16 %v450, %v446
    %v527 = vpack.c.b16 %v451, %v447
    %v528 = vpack.c.b16 %v452, %v448
    %v529 = vpack.c.b16 %v457, %v453
    %v530 = vpack.c.b16 %v458, %v454
    %v531 = vpack.c.b16 %v459, %v455
    %v532 = vpack.c.b16 %v460, %v456
    %v533 = vpack.c.b16 %v465, %v461
    %v534 = vpack.c.b16 %v466, %v462
    %v535 = vpack.c.b16 %v467, %v463
    %v536 = vpack.c.b16 %v468, %v464
    %v537 = vpack.c.b16 %v473, %v469
    %v538 = vpack.c.b16 %v474, %v470
    %v539 = vpack.c.b16 %v475, %v471
    %v540 = vpack.c.b16 %v476, %v472
    %605 = vmatprep.subr.bf16.mxu0 %v506
    %606 = vmatpush1.bf16.msra.mxu0 %v505
    %607 = vmatprep.subr.bf16.mxu0 %v502
    %608 = vmatpush1.bf16.msra.mxu0 %v501
    %609 = vmatprep.subr.bf16.mxu0 %v498
    %610 = vmatpush1.bf16.msra.mxu0 %v497
    %611 = vmatprep.subr.bf16.mxu0 %v494
    %612 = vmatpush1.bf16.msra.mxu0 %v493
    %613 = vmatprep.subr.bf16.mxu0 %v490
    %614 = vmatpush1.bf16.msra.mxu0 %v489
    %615 = vmatprep.subr.bf16.mxu0 %v486
    %616 = vmatpush1.bf16.msra.mxu0 %v485
    %617 = vmatprep.subr.bf16.mxu0 %v482
    %618 = vmatpush1.bf16.msra.mxu0 %v481
    %619 = vmatprep.subr.bf16.mxu0 %v478
    %620 = vmatpush1.bf16.msra.mxu0 %v477
    %621 = vmatprep.subr.bf16.mxu0 %v538
    %622 = vmatpush2.bf16.msra.mxu0 %v537
    %623 = vmatprep.subr.bf16.mxu0 %v534
    %624 = vmatpush2.bf16.msra.mxu0 %v533
    %625 = vmatprep.subr.bf16.mxu0 %v530
    %626 = vmatpush2.bf16.msra.mxu0 %v529
    %627 = vmatprep.subr.bf16.mxu0 %v526
    %628 = vmatpush2.bf16.msra.mxu0 %v525
    %629 = vmatprep.subr.bf16.mxu0 %v522
    %630 = vmatpush2.bf16.msra.mxu0 %v521
    %631 = vmatprep.subr.bf16.mxu0 %v518
    %632 = vmatpush2.bf16.msra.mxu0 %v517
    %633 = vmatprep.subr.bf16.mxu0 %v514
    %634 = vmatpush2.bf16.msra.mxu0 %v513
    %635 = vmatprep.subr.bf16.mxu0 %v510
    %636 = vmatpush2.bf16.msra.mxu0 %v509
    %637 = vmatprep.mubr.bf16.mxu0 %v198
    %638 = vmatmul.mubr.bf16.gmra.mxu0 %v197
    %v639 = vpop.f32.mrf.mxu0
    %v640 = vadd.f32 %v268, %v639
    %v641 = vpop.f32.mrf.mxu0
    %v642 = vadd.f32 %v272, %v641
    %v643 = vpop.f32.mrf.mxu0
    %v644 = vpop.f32.mrf.mxu0
    %645 = vdwg.mxu0
    %646 = vmatprep.subr.bf16.mxu0 %v508
    %647 = vmatpush1.bf16.msra.mxu0 %v507
    %648 = vmatprep.subr.bf16.mxu0 %v504
    %649 = vmatpush1.bf16.msra.mxu0 %v503
    %650 = vmatprep.subr.bf16.mxu0 %v500
    %651 = vmatpush1.bf16.msra.mxu0 %v499
    %652 = vmatprep.subr.bf16.mxu0 %v496
    %653 = vmatpush1.bf16.msra.mxu0 %v495
    %654 = vmatprep.subr.bf16.mxu0 %v492
    %655 = vmatpush1.bf16.msra.mxu0 %v491
    %656 = vmatprep.subr.bf16.mxu0 %v488
    %657 = vmatpush1.bf16.msra.mxu0 %v487
    %658 = vmatprep.subr.bf16.mxu0 %v484
    %659 = vmatpush1.bf16.msra.mxu0 %v483
    %660 = vmatprep.subr.bf16.mxu0 %v480
    %661 = vmatpush1.bf16.msra.mxu0 %v479
    %662 = vmatprep.subr.bf16.mxu0 %v540
    %663 = vmatpush2.bf16.msra.mxu0 %v539
    %664 = vmatprep.subr.bf16.mxu0 %v536
    %665 = vmatpush2.bf16.msra.mxu0 %v535
    %666 = vmatprep.subr.bf16.mxu0 %v532
    %667 = vmatpush2.bf16.msra.mxu0 %v531
    %668 = vmatprep.subr.bf16.mxu0 %v528
    %669 = vmatpush2.bf16.msra.mxu0 %v527
    %670 = vmatprep.subr.bf16.mxu0 %v524
    %671 = vmatpush2.bf16.msra.mxu0 %v523
    %672 = vmatprep.subr.bf16.mxu0 %v520
    %673 = vmatpush2.bf16.msra.mxu0 %v519
    %674 = vmatprep.subr.bf16.mxu0 %v516
    %675 = vmatpush2.bf16.msra.mxu0 %v515
    %676 = vmatprep.subr.bf16.mxu0 %v512
    %677 = vmatpush2.bf16.msra.mxu0 %v511
    %678 = vmatprep.mubr.bf16.mxu0 %v198
    %679 = vmatmul.mubr.bf16.gmra.mxu0 %v197
    %v680 = vpop.f32.mrf.mxu0
    %v681 = vadd.f32 %v276, %v680
    %v682 = vpop.f32.mrf.mxu0
    %v683 = vadd.f32 %v280, %v682
    %v684 = vpop.f32.mrf.mxu0
    %v685 = vpop.f32.mrf.mxu0
    %686 = vdwg.mxu0
    %v687 = vmax.f32 %v640, 0.0
    %v688 = vmax.f32 %v642, 0.0
    %v689 = vmax.f32 %v681, 0.0
    %v690 = vmax.f32 %v683, 0.0
    %v691 = vpack.c.bf16 %v687, %v687
    %v692 = vpack.c.bf16 %v688, %v688
    %v693 = vpack.c.bf16 %v689, %v689
    %v694 = vpack.c.bf16 %v690, %v690
    %v695 = vld [vmem:[#allocation10] sm:$0xff]
    %v696 = vld [vmem:[#allocation10 + $0x8] sm:$0xff]
    %v697 = vld [vmem:[#allocation10 + $0x10] sm:$0xf]
    %v698 = vld [vmem:[#allocation10 + $0x14] sm:$0xff]
    %v699 = vld [vmem:[#allocation10 + $0x1c] sm:$0xff]
    %v700 = vld [vmem:[#allocation10 + $0x24] sm:$0xf]
    %v701 = vld [vmem:[#allocation10 + $0x28] sm:$0xff]
    %v702 = vld [vmem:[#allocation10 + $0x30] sm:$0xff]
    %v703 = vld [vmem:[#allocation10 + $0x38] sm:$0xf]
    %v704 = vld [vmem:[#allocation10 + $0x3c] sm:$0xff]
    %v705 = vld [vmem:[#allocation10 + $0x44] sm:$0xff]
    %v706 = vld [vmem:[#allocation10 + $0x4c] sm:$0xf]
    %v707 = vld [vmem:[#allocation10 + $0x50] sm:$0xff]
    %v708 = vld [vmem:[#allocation10 + $0x58] sm:$0xff]
    %v709 = vld [vmem:[#allocation10 + $0x60] sm:$0xf]
    %v710 = vld [vmem:[#allocation10 + $0x64] sm:$0xff]
    %v711 = vld [vmem:[#allocation10 + $0x6c] sm:$0xff]
    %v712 = vld [vmem:[#allocation10 + $0x74] sm:$0xf]
    %v713 = vld [vmem:[#allocation10 + $0x78] sm:$0xff]
    %v714 = vld [vmem:[#allocation10 + $0x80] sm:$0xff]
    %v715 = vld [vmem:[#allocation10 + $0x88] sm:$0xf]
    %v716 = vld [vmem:[#allocation10 + $0x8c] sm:$0xff]
    %v717 = vld [vmem:[#allocation10 + $0x94] sm:$0xff]
    %v718 = vld [vmem:[#allocation10 + $0x9c] sm:$0xf]
    %v719 = vld [vmem:[#allocation10 + $0xa0] sm:$0xff]
    %v720 = vld [vmem:[#allocation10 + $0xa8] sm:$0xff]
    %v721 = vld [vmem:[#allocation10 + $0xb0] sm:$0xf]
    %v722 = vld [vmem:[#allocation10 + $0xb4] sm:$0xff]
    %v723 = vld [vmem:[#allocation10 + $0xbc] sm:$0xff]
    %v724 = vld [vmem:[#allocation10 + $0xc4] sm:$0xf]
    %v725 = vld [vmem:[#allocation10 + $0xc8] sm:$0xff]
    %v726 = vld [vmem:[#allocation10 + $0xd0] sm:$0xff]
    %v727 = vld [vmem:[#allocation10 + $0xd8] sm:$0xf]
    %v728 = vld [vmem:[#allocation10 + $0xdc] sm:$0xff]
    %v729 = vld [vmem:[#allocation10 + $0xe4] sm:$0xff]
    %v730 = vld [vmem:[#allocation10 + $0xec] sm:$0xf]
    %v731 = vld [vmem:[#allocation10 + $0xf0] sm:$0xff]
    %v732 = vld [vmem:[#allocation10 + $0xf8] sm:$0xff]
    %v733 = vld [vmem:[#allocation10 + $0x100] sm:$0xf]
    %v734 = vld [vmem:[#allocation10 + $0x104] sm:$0xff]
    %v735 = vld [vmem:[#allocation10 + $0x10c] sm:$0xff]
    %v736 = vld [vmem:[#allocation10 + $0x114] sm:$0xf]
    %v737 = vld [vmem:[#allocation10 + $0x118] sm:$0xff]
    %v738 = vld [vmem:[#allocation10 + $0x120] sm:$0xff]
    %v739 = vld [vmem:[#allocation10 + $0x128] sm:$0xf]
    %v740 = vld [vmem:[#allocation10 + $0x12c] sm:$0xff]
    %v741 = vld [vmem:[#allocation10 + $0x134] sm:$0xff]
    %v742 = vld [vmem:[#allocation10 + $0x13c] sm:$0xf]
    %v743 = vld [vmem:[#allocation10 + $0x140] sm:$0xff]
    %v744 = vld [vmem:[#allocation10 + $0x148] sm:$0xff]
    %v745 = vld [vmem:[#allocation10 + $0x150] sm:$0xf]
    %v746 = vld [vmem:[#allocation10 + $0x154] sm:$0xff]
    %v747 = vld [vmem:[#allocation10 + $0x15c] sm:$0xff]
    %v748 = vld [vmem:[#allocation10 + $0x164] sm:$0xf]
    %v749 = vld [vmem:[#allocation10 + $0x168] sm:$0xff]
    %v750 = vld [vmem:[#allocation10 + $0x170] sm:$0xff]
    %v751 = vld [vmem:[#allocation10 + $0x178] sm:$0xf]
    %v752 = vld [vmem:[#allocation10 + $0x17c] sm:$0xff]
    %v753 = vld [vmem:[#allocation10 + $0x184] sm:$0xff]
    %v754 = vld [vmem:[#allocation10 + $0x18c] sm:$0xf]
    %v755 = vld [vmem:[#allocation10 + $0x190] sm:$0xff]
    %v756 = vld [vmem:[#allocation10 + $0x198] sm:$0xff]
    %v757 = vld [vmem:[#allocation10 + $0x1a0] sm:$0xf]
    %v758 = vld [vmem:[#allocation10 + $0x1a4] sm:$0xff]
    %v759 = vld [vmem:[#allocation10 + $0x1ac] sm:$0xff]
    %v760 = vld [vmem:[#allocation10 + $0x1b4] sm:$0xf]
    %v761 = vld [vmem:[#allocation10 + $0x1b8] sm:$0xff]
    %v762 = vld [vmem:[#allocation10 + $0x1c0] sm:$0xff]
    %v763 = vld [vmem:[#allocation10 + $0x1c8] sm:$0xf]
    %v764 = vld [vmem:[#allocation10 + $0x1cc] sm:$0xff]
    %v765 = vld [vmem:[#allocation10 + $0x1d4] sm:$0xff]
    %v766 = vld [vmem:[#allocation10 + $0x1dc] sm:$0xf]
    %v767 = vld [vmem:[#allocation10 + $0x1e0] sm:$0xff]
    %v768 = vld [vmem:[#allocation10 + $0x1e8] sm:$0xff]
    %v769 = vld [vmem:[#allocation10 + $0x1f0] sm:$0xf]
    %v770 = vld [vmem:[#allocation10 + $0x1f4] sm:$0xff]
    %v771 = vld [vmem:[#allocation10 + $0x1fc] sm:$0xff]
    %v772 = vld [vmem:[#allocation10 + $0x204] sm:$0xf]
    %v773 = vld [vmem:[#allocation10 + $0x208] sm:$0xff]
    %v774 = vld [vmem:[#allocation10 + $0x210] sm:$0xff]
    %v775 = vld [vmem:[#allocation10 + $0x218] sm:$0xf]
    %v776 = vld [vmem:[#allocation10 + $0x21c] sm:$0xff]
    %v777 = vld [vmem:[#allocation10 + $0x224] sm:$0xff]
    %v778 = vld [vmem:[#allocation10 + $0x22c] sm:$0xf]
    %v779 = vld [vmem:[#allocation10 + $0x230] sm:$0xff]
    %v780 = vld [vmem:[#allocation10 + $0x238] sm:$0xff]
    %v781 = vld [vmem:[#allocation10 + $0x240] sm:$0xf]
    %v782 = vld [vmem:[#allocation10 + $0x244] sm:$0xff]
    %v783 = vld [vmem:[#allocation10 + $0x24c] sm:$0xff]
    %v784 = vld [vmem:[#allocation10 + $0x254] sm:$0xf]
    %v785 = vld [vmem:[#allocation10 + $0x258] sm:$0xff]
    %v786 = vld [vmem:[#allocation10 + $0x260] sm:$0xff]
    %v787 = vld [vmem:[#allocation10 + $0x268] sm:$0xf]
    %v788 = vld [vmem:[#allocation10 + $0x26c] sm:$0xff]
    %v789 = vld [vmem:[#allocation10 + $0x274] sm:$0xff]
    %v790 = vld [vmem:[#allocation10 + $0x27c] sm:$0xf]
    %v791 = vld [vmem:[#allocation10 + $0x280] sm:$0xff]
    %v792 = vld [vmem:[#allocation10 + $0x288] sm:$0xff]
    %v793 = vld [vmem:[#allocation10 + $0x290] sm:$0xf]
    %v794 = vld [vmem:[#allocation10 + $0x294] sm:$0xff]
    %v795 = vld [vmem:[#allocation10 + $0x29c] sm:$0xff]
    %v796 = vld [vmem:[#allocation10 + $0x2a4] sm:$0xf]
    %v797 = vld [vmem:[#allocation10 + $0x2a8] sm:$0xff]
    %v798 = vld [vmem:[#allocation10 + $0x2b0] sm:$0xff]
    %v799 = vld [vmem:[#allocation10 + $0x2b8] sm:$0xf]
    %v800 = vld [vmem:[#allocation10 + $0x2bc] sm:$0xff]
    %v801 = vld [vmem:[#allocation10 + $0x2c4] sm:$0xff]
    %v802 = vld [vmem:[#allocation10 + $0x2cc] sm:$0xf]
    %v803 = vld [vmem:[#allocation10 + $0x2d0] sm:$0xff]
    %v804 = vld [vmem:[#allocation10 + $0x2d8] sm:$0xff]
    %v805 = vld [vmem:[#allocation10 + $0x2e0] sm:$0xf]
    %v806 = vld [vmem:[#allocation10 + $0x2e4] sm:$0xff]
    %v807 = vld [vmem:[#allocation10 + $0x2ec] sm:$0xff]
    %v808 = vld [vmem:[#allocation10 + $0x2f4] sm:$0xf]
    %v809 = vld [vmem:[#allocation10 + $0x2f8] sm:$0xff]
    %v810 = vld [vmem:[#allocation10 + $0x300] sm:$0xff]
    %v811 = vld [vmem:[#allocation10 + $0x308] sm:$0xf]
    %v812 = vld [vmem:[#allocation10 + $0x30c] sm:$0xff]
    %v813 = vld [vmem:[#allocation10 + $0x314] sm:$0xff]
    %v814 = vld [vmem:[#allocation10 + $0x31c] sm:$0xf]
    %v815 = vld [vmem:[#allocation10 + $0x320] sm:$0xff]
    %v816 = vld [vmem:[#allocation10 + $0x328] sm:$0xff]
    %v817 = vld [vmem:[#allocation10 + $0x330] sm:$0xf]
    %v818 = vld [vmem:[#allocation10 + $0x334] sm:$0xff]
    %v819 = vld [vmem:[#allocation10 + $0x33c] sm:$0xff]
    %v820 = vld [vmem:[#allocation10 + $0x344] sm:$0xf]
    %v821 = vld [vmem:[#allocation10 + $0x348] sm:$0xff]
    %v822 = vld [vmem:[#allocation10 + $0x350] sm:$0xff]
    %v823 = vld [vmem:[#allocation10 + $0x358] sm:$0xf]
    %v824 = vld [vmem:[#allocation10 + $0x35c] sm:$0xff]
    %v825 = vld [vmem:[#allocation10 + $0x364] sm:$0xff]
    %v826 = vld [vmem:[#allocation10 + $0x36c] sm:$0xf]
    %v827 = vld [vmem:[#allocation10 + $0x370] sm:$0xff]
    %v828 = vld [vmem:[#allocation10 + $0x378] sm:$0xff]
    %v829 = vld [vmem:[#allocation10 + $0x380] sm:$0xf]
    %v830 = vld [vmem:[#allocation10 + $0x384] sm:$0xff]
    %v831 = vld [vmem:[#allocation10 + $0x38c] sm:$0xff]
    %v832 = vld [vmem:[#allocation10 + $0x394] sm:$0xf]
    %v833 = vld [vmem:[#allocation10 + $0x398] sm:$0xff]
    %v834 = vld [vmem:[#allocation10 + $0x3a0] sm:$0xff]
    %v835 = vld [vmem:[#allocation10 + $0x3a8] sm:$0xf]
    %v836 = vld [vmem:[#allocation10 + $0x3ac] sm:$0xff]
    %v837 = vld [vmem:[#allocation10 + $0x3b4] sm:$0xff]
    %v838 = vld [vmem:[#allocation10 + $0x3bc] sm:$0xf]
    %v839 = vld [vmem:[#allocation10 + $0x3c0] sm:$0xff]
    %v840 = vld [vmem:[#allocation10 + $0x3c8] sm:$0xff]
    %v841 = vld [vmem:[#allocation10 + $0x3d0] sm:$0xf]
    %v842 = vld [vmem:[#allocation10 + $0x3d4] sm:$0xff]
    %v843 = vld [vmem:[#allocation10 + $0x3dc] sm:$0xff]
    %v844 = vld [vmem:[#allocation10 + $0x3e4] sm:$0xf]
    %v845 = vld [vmem:[#allocation10 + $0x3e8] sm:$0xff]
    %v846 = vld [vmem:[#allocation10 + $0x3f0] sm:$0xff]
    %v847 = vld [vmem:[#allocation10 + $0x3f8] sm:$0xf]
    %v848 = vld [vmem:[#allocation10 + $0x3fc] sm:$0xff]
    %v849 = vld [vmem:[#allocation10 + $0x404] sm:$0xff]
    %v850 = vld [vmem:[#allocation10 + $0x40c] sm:$0xf]
    %v851 = vld [vmem:[#allocation10 + $0x410] sm:$0xff]
    %v852 = vld [vmem:[#allocation10 + $0x418] sm:$0xff]
    %v853 = vld [vmem:[#allocation10 + $0x420] sm:$0xf]
    %v854 = vld [vmem:[#allocation10 + $0x424] sm:$0xff]
    %v855 = vld [vmem:[#allocation10 + $0x42c] sm:$0xff]
    %v856 = vld [vmem:[#allocation10 + $0x434] sm:$0xf]
    %v857 = vld [vmem:[#allocation10 + $0x438] sm:$0xff]
    %v858 = vld [vmem:[#allocation10 + $0x440] sm:$0xff]
    %v859 = vld [vmem:[#allocation10 + $0x448] sm:$0xf]
    %v860 = vld [vmem:[#allocation10 + $0x44c] sm:$0xff]
    %v861 = vld [vmem:[#allocation10 + $0x454] sm:$0xff]
    %v862 = vld [vmem:[#allocation10 + $0x45c] sm:$0xf]
    %v863 = vld [vmem:[#allocation10 + $0x460] sm:$0xff]
    %v864 = vld [vmem:[#allocation10 + $0x468] sm:$0xff]
    %v865 = vld [vmem:[#allocation10 + $0x470] sm:$0xf]
    %v866 = vld [vmem:[#allocation10 + $0x474] sm:$0xff]
    %v867 = vld [vmem:[#allocation10 + $0x47c] sm:$0xff]
    %v868 = vld [vmem:[#allocation10 + $0x484] sm:$0xf]
    %v869 = vld [vmem:[#allocation10 + $0x488] sm:$0xff]
    %v870 = vld [vmem:[#allocation10 + $0x490] sm:$0xff]
    %v871 = vld [vmem:[#allocation10 + $0x498] sm:$0xf]
    %v872 = vld [vmem:[#allocation10 + $0x49c] sm:$0xff]
    %v873 = vld [vmem:[#allocation10 + $0x4a4] sm:$0xff]
    %v874 = vld [vmem:[#allocation10 + $0x4ac] sm:$0xf]
    %v875 = vld [vmem:[#allocation10 + $0x4b0] sm:$0xff]
    %v876 = vld [vmem:[#allocation10 + $0x4b8] sm:$0xff]
    %v877 = vld [vmem:[#allocation10 + $0x4c0] sm:$0xf]
    %v878 = vld [vmem:[#allocation10 + $0x4c4] sm:$0xff]
    %v879 = vld [vmem:[#allocation10 + $0x4cc] sm:$0xff]
    %v880 = vld [vmem:[#allocation10 + $0x4d4] sm:$0xf]
    %v881 = vld [vmem:[#allocation10 + $0x4d8] sm:$0xff]
    %v882 = vld [vmem:[#allocation10 + $0x4e0] sm:$0xff]
    %v883 = vld [vmem:[#allocation10 + $0x4e8] sm:$0xf]
    %v884 = vld [vmem:[#allocation10 + $0x4ec] sm:$0xff]
    %v885 = vld [vmem:[#allocation10 + $0x4f4] sm:$0xff]
    %v886 = vld [vmem:[#allocation10 + $0x4fc] sm:$0xf]
    %v887 = vld [vmem:[%s6] sm:$0x1f]
    %v889 = vlaneseq
    %v890 = vshrl.u32 %v889, 7
    %v891 = vsub.s32 0, %v890
    %v892 = vrot.slane %v887, %v891
    %v893 = vlaneseq
    %v894 = vshrl.u32 %v893, 7
    %v895 = vsub.s32 1, %v894
    %v896 = vrot.slane %v887, %v895
    %v897 = vlaneseq
    %v898 = vshrl.u32 %v897, 7
    %v899 = vsub.s32 2, %v898
    %v900 = vrot.slane %v887, %v899
    %v901 = vlaneseq
    %v902 = vshrl.u32 %v901, 7
    %v903 = vsub.s32 3, %v902
    %v904 = vrot.slane %v887, %v903
    %v905 = vlaneseq
    %v906 = vshrl.u32 %v905, 7
    %v907 = vsub.s32 4, %v906
    %v908 = vrot.slane %v887, %v907
    %v1106 = vunpack.c.l.b16 %v695
    %v1107 = vunpack.c.h.b16 %v695
    %v1108 = vunpack.c.l.b16 %v696
    %v1109 = vunpack.c.h.b16 %v696
    %v1110 = vunpack.c.l.b16 %v697
    %v1111 = vunpack.c.l.b16 %v698
    %v1112 = vunpack.c.h.b16 %v698
    %v1113 = vunpack.c.l.b16 %v699
    %v1114 = vunpack.c.h.b16 %v699
    %v1115 = vunpack.c.l.b16 %v700
    %v1116 = vunpack.c.l.b16 %v701
    %v1117 = vunpack.c.h.b16 %v701
    %v1118 = vunpack.c.l.b16 %v702
    %v1119 = vunpack.c.h.b16 %v702
    %v1120 = vunpack.c.l.b16 %v703
    %v1121 = vunpack.c.l.b16 %v704
    %v1122 = vunpack.c.h.b16 %v704
    %v1123 = vunpack.c.l.b16 %v705
    %v1124 = vunpack.c.h.b16 %v705
    %v1125 = vunpack.c.l.b16 %v706
    %v1126 = vunpack.c.l.b16 %v707
    %v1127 = vunpack.c.h.b16 %v707
    %v1128 = vunpack.c.l.b16 %v708
    %v1129 = vunpack.c.h.b16 %v708
    %v1130 = vunpack.c.l.b16 %v709
    %v1131 = vunpack.c.l.b16 %v710
    %v1132 = vunpack.c.h.b16 %v710
    %v1133 = vunpack.c.l.b16 %v711
    %v1134 = vunpack.c.h.b16 %v711
    %v1135 = vunpack.c.l.b16 %v712
    %v1136 = vunpack.c.l.b16 %v713
    %v1137 = vunpack.c.h.b16 %v713
    %v1138 = vunpack.c.l.b16 %v714
    %v1139 = vunpack.c.h.b16 %v714
    %v1140 = vunpack.c.l.b16 %v715
    %v1141 = vunpack.c.l.b16 %v716
    %v1142 = vunpack.c.h.b16 %v716
    %v1143 = vunpack.c.l.b16 %v717
    %v1144 = vunpack.c.h.b16 %v717
    %v1145 = vunpack.c.l.b16 %v718
    %v1146 = vunpack.c.l.b16 %v719
    %v1147 = vunpack.c.h.b16 %v719
    %v1148 = vunpack.c.l.b16 %v720
    %v1149 = vunpack.c.h.b16 %v720
    %v1150 = vunpack.c.l.b16 %v721
    %v1151 = vunpack.c.l.b16 %v722
    %v1152 = vunpack.c.h.b16 %v722
    %v1153 = vunpack.c.l.b16 %v723
    %v1154 = vunpack.c.h.b16 %v723
    %v1155 = vunpack.c.l.b16 %v724
    %v1156 = vunpack.c.l.b16 %v725
    %v1157 = vunpack.c.h.b16 %v725
    %v1158 = vunpack.c.l.b16 %v726
    %v1159 = vunpack.c.h.b16 %v726
    %v1160 = vunpack.c.l.b16 %v727
    %v1161 = vunpack.c.l.b16 %v728
    %v1162 = vunpack.c.h.b16 %v728
    %v1163 = vunpack.c.l.b16 %v729
    %v1164 = vunpack.c.h.b16 %v729
    %v1165 = vunpack.c.l.b16 %v730
    %v1166 = vunpack.c.l.b16 %v731
    %v1167 = vunpack.c.h.b16 %v731
    %v1168 = vunpack.c.l.b16 %v732
    %v1169 = vunpack.c.h.b16 %v732
    %v1170 = vunpack.c.l.b16 %v733
    %v1171 = vunpack.c.l.b16 %v734
    %v1172 = vunpack.c.h.b16 %v734
    %v1173 = vunpack.c.l.b16 %v735
    %v1174 = vunpack.c.h.b16 %v735
    %v1175 = vunpack.c.l.b16 %v736
    %v1176 = vunpack.c.l.b16 %v737
    %v1177 = vunpack.c.h.b16 %v737
    %v1178 = vunpack.c.l.b16 %v738
    %v1179 = vunpack.c.h.b16 %v738
    %v1180 = vunpack.c.l.b16 %v739
    %v1181 = vunpack.c.l.b16 %v740
    %v1182 = vunpack.c.h.b16 %v740
    %v1183 = vunpack.c.l.b16 %v741
    %v1184 = vunpack.c.h.b16 %v741
    %v1185 = vunpack.c.l.b16 %v742
    %v1186 = vunpack.c.l.b16 %v743
    %v1187 = vunpack.c.h.b16 %v743
    %v1188 = vunpack.c.l.b16 %v744
    %v1189 = vunpack.c.h.b16 %v744
    %v1190 = vunpack.c.l.b16 %v745
    %v1191 = vunpack.c.l.b16 %v746
    %v1192 = vunpack.c.h.b16 %v746
    %v1193 = vunpack.c.l.b16 %v747
    %v1194 = vunpack.c.h.b16 %v747
    %v1195 = vunpack.c.l.b16 %v748
    %v1196 = vunpack.c.l.b16 %v749
    %v1197 = vunpack.c.h.b16 %v749
    %v1198 = vunpack.c.l.b16 %v750
    %v1199 = vunpack.c.h.b16 %v750
    %v1200 = vunpack.c.l.b16 %v751
    %v1201 = vunpack.c.l.b16 %v752
    %v1202 = vunpack.c.h.b16 %v752
    %v1203 = vunpack.c.l.b16 %v753
    %v1204 = vunpack.c.h.b16 %v753
    %v1205 = vunpack.c.l.b16 %v754
    %v1206 = vunpack.c.l.b16 %v755
    %v1207 = vunpack.c.h.b16 %v755
    %v1208 = vunpack.c.l.b16 %v756
    %v1209 = vunpack.c.h.b16 %v756
    %v1210 = vunpack.c.l.b16 %v757
    %v1211 = vunpack.c.l.b16 %v758
    %v1212 = vunpack.c.h.b16 %v758
    %v1213 = vunpack.c.l.b16 %v759
    %v1214 = vunpack.c.h.b16 %v759
    %v1215 = vunpack.c.l.b16 %v760
    %v1216 = vunpack.c.l.b16 %v761
    %v1217 = vunpack.c.h.b16 %v761
    %v1218 = vunpack.c.l.b16 %v762
    %v1219 = vunpack.c.h.b16 %v762
    %v1220 = vunpack.c.l.b16 %v763
    %v1221 = vunpack.c.l.b16 %v764
    %v1222 = vunpack.c.h.b16 %v764
    %v1223 = vunpack.c.l.b16 %v765
    %v1224 = vunpack.c.h.b16 %v765
    %v1225 = vunpack.c.l.b16 %v766
    %v1226 = vunpack.c.l.b16 %v767
    %v1227 = vunpack.c.h.b16 %v767
    %v1228 = vunpack.c.l.b16 %v768
    %v1229 = vunpack.c.h.b16 %v768
    %v1230 = vunpack.c.l.b16 %v769
    %v1231 = vunpack.c.l.b16 %v770
    %v1232 = vunpack.c.h.b16 %v770
    %v1233 = vunpack.c.l.b16 %v771
    %v1234 = vunpack.c.h.b16 %v771
    %v1235 = vunpack.c.l.b16 %v772
    %v1236 = vunpack.c.l.b16 %v773
    %v1237 = vunpack.c.h.b16 %v773
    %v1238 = vunpack.c.l.b16 %v774
    %v1239 = vunpack.c.h.b16 %v774
    %v1240 = vunpack.c.l.b16 %v775
    %v1241 = vunpack.c.l.b16 %v776
    %v1242 = vunpack.c.h.b16 %v776
    %v1243 = vunpack.c.l.b16 %v777
    %v1244 = vunpack.c.h.b16 %v777
    %v1245 = vunpack.c.l.b16 %v778
    %v1246 = vunpack.c.l.b16 %v779
    %v1247 = vunpack.c.h.b16 %v779
    %v1248 = vunpack.c.l.b16 %v780
    %v1249 = vunpack.c.h.b16 %v780
    %v1250 = vunpack.c.l.b16 %v781
    %v1251 = vunpack.c.l.b16 %v782
    %v1252 = vunpack.c.h.b16 %v782
    %v1253 = vunpack.c.l.b16 %v783
    %v1254 = vunpack.c.h.b16 %v783
    %v1255 = vunpack.c.l.b16 %v784
    %v1256 = vunpack.c.l.b16 %v785
    %v1257 = vunpack.c.h.b16 %v785
    %v1258 = vunpack.c.l.b16 %v786
    %v1259 = vunpack.c.h.b16 %v786
    %v1260 = vunpack.c.l.b16 %v787
    %v1261 = vunpack.c.l.b16 %v788
    %v1262 = vunpack.c.h.b16 %v788
    %v1263 = vunpack.c.l.b16 %v789
    %v1264 = vunpack.c.h.b16 %v789
    %v1265 = vunpack.c.l.b16 %v790
    %v1266 = vunpack.c.l.b16 %v791
    %v1267 = vunpack.c.h.b16 %v791
    %v1268 = vunpack.c.l.b16 %v792
    %v1269 = vunpack.c.h.b16 %v792
    %v1270 = vunpack.c.l.b16 %v793
    %v1271 = vunpack.c.l.b16 %v794
    %v1272 = vunpack.c.h.b16 %v794
    %v1273 = vunpack.c.l.b16 %v795
    %v1274 = vunpack.c.h.b16 %v795
    %v1275 = vunpack.c.l.b16 %v796
    %v1276 = vunpack.c.l.b16 %v797
    %v1277 = vunpack.c.h.b16 %v797
    %v1278 = vunpack.c.l.b16 %v798
    %v1279 = vunpack.c.h.b16 %v798
    %v1280 = vunpack.c.l.b16 %v799
    %v1281 = vunpack.c.l.b16 %v800
    %v1282 = vunpack.c.h.b16 %v800
    %v1283 = vunpack.c.l.b16 %v801
    %v1284 = vunpack.c.h.b16 %v801
    %v1285 = vunpack.c.l.b16 %v802
    %v1286 = vunpack.c.l.b16 %v803
    %v1287 = vunpack.c.h.b16 %v803
    %v1288 = vunpack.c.l.b16 %v804
    %v1289 = vunpack.c.h.b16 %v804
    %v1290 = vunpack.c.l.b16 %v805
    %v1291 = vunpack.c.l.b16 %v806
    %v1292 = vunpack.c.h.b16 %v806
    %v1293 = vunpack.c.l.b16 %v807
    %v1294 = vunpack.c.h.b16 %v807
    %v1295 = vunpack.c.l.b16 %v808
    %v1296 = vunpack.c.l.b16 %v809
    %v1297 = vunpack.c.h.b16 %v809
    %v1298 = vunpack.c.l.b16 %v810
    %v1299 = vunpack.c.h.b16 %v810
    %v1300 = vunpack.c.l.b16 %v811
    %v1301 = vunpack.c.l.b16 %v812
    %v1302 = vunpack.c.h.b16 %v812
    %v1303 = vunpack.c.l.b16 %v813
    %v1304 = vunpack.c.h.b16 %v813
    %v1305 = vunpack.c.l.b16 %v814
    %v1306 = vunpack.c.l.b16 %v815
    %v1307 = vunpack.c.h.b16 %v815
    %v1308 = vunpack.c.l.b16 %v816
    %v1309 = vunpack.c.h.b16 %v816
    %v1310 = vunpack.c.l.b16 %v817
    %v1311 = vunpack.c.l.b16 %v818
    %v1312 = vunpack.c.h.b16 %v818
    %v1313 = vunpack.c.l.b16 %v819
    %v1314 = vunpack.c.h.b16 %v819
    %v1315 = vunpack.c.l.b16 %v820
    %v1316 = vunpack.c.l.b16 %v821
    %v1317 = vunpack.c.h.b16 %v821
    %v1318 = vunpack.c.l.b16 %v822
    %v1319 = vunpack.c.h.b16 %v822
    %v1320 = vunpack.c.l.b16 %v823
    %v1321 = vunpack.c.l.b16 %v824
    %v1322 = vunpack.c.h.b16 %v824
    %v1323 = vunpack.c.l.b16 %v825
    %v1324 = vunpack.c.h.b16 %v825
    %v1325 = vunpack.c.l.b16 %v826
    %v1326 = vunpack.c.l.b16 %v827
    %v1327 = vunpack.c.h.b16 %v827
    %v1328 = vunpack.c.l.b16 %v828
    %v1329 = vunpack.c.h.b16 %v828
    %v1330 = vunpack.c.l.b16 %v829
    %v1331 = vunpack.c.l.b16 %v830
    %v1332 = vunpack.c.h.b16 %v830
    %v1333 = vunpack.c.l.b16 %v831
    %v1334 = vunpack.c.h.b16 %v831
    %v1335 = vunpack.c.l.b16 %v832
    %v1336 = vunpack.c.l.b16 %v833
    %v1337 = vunpack.c.h.b16 %v833
    %v1338 = vunpack.c.l.b16 %v834
    %v1339 = vunpack.c.h.b16 %v834
    %v1340 = vunpack.c.l.b16 %v835
    %v1341 = vunpack.c.l.b16 %v836
    %v1342 = vunpack.c.h.b16 %v836
    %v1343 = vunpack.c.l.b16 %v837
    %v1344 = vunpack.c.h.b16 %v837
    %v1345 = vunpack.c.l.b16 %v838
    %v1346 = vunpack.c.l.b16 %v839
    %v1347 = vunpack.c.h.b16 %v839
    %v1348 = vunpack.c.l.b16 %v840
    %v1349 = vunpack.c.h.b16 %v840
    %v1350 = vunpack.c.l.b16 %v841
    %v1351 = vunpack.c.l.b16 %v842
    %v1352 = vunpack.c.h.b16 %v842
    %v1353 = vunpack.c.l.b16 %v843
    %v1354 = vunpack.c.h.b16 %v843
    %v1355 = vunpack.c.l.b16 %v844
    %v1356 = vunpack.c.l.b16 %v845
    %v1357 = vunpack.c.h.b16 %v845
    %v1358 = vunpack.c.l.b16 %v846
    %v1359 = vunpack.c.h.b16 %v846
    %v1360 = vunpack.c.l.b16 %v847
    %v1361 = vunpack.c.l.b16 %v848
    %v1362 = vunpack.c.h.b16 %v848
    %v1363 = vunpack.c.l.b16 %v849
    %v1364 = vunpack.c.h.b16 %v849
    %v1365 = vunpack.c.l.b16 %v850
    %v1366 = vunpack.c.l.b16 %v851
    %v1367 = vunpack.c.h.b16 %v851
    %v1368 = vunpack.c.l.b16 %v852
    %v1369 = vunpack.c.h.b16 %v852
    %v1370 = vunpack.c.l.b16 %v853
    %v1371 = vunpack.c.l.b16 %v854
    %v1372 = vunpack.c.h.b16 %v854
    %v1373 = vunpack.c.l.b16 %v855
    %v1374 = vunpack.c.h.b16 %v855
    %v1375 = vunpack.c.l.b16 %v856
    %v1376 = vunpack.c.l.b16 %v857
    %v1377 = vunpack.c.h.b16 %v857
    %v1378 = vunpack.c.l.b16 %v858
    %v1379 = vunpack.c.h.b16 %v858
    %v1380 = vunpack.c.l.b16 %v859
    %v1381 = vunpack.c.l.b16 %v860
    %v1382 = vunpack.c.h.b16 %v860
    %v1383 = vunpack.c.l.b16 %v861
    %v1384 = vunpack.c.h.b16 %v861
    %v1385 = vunpack.c.l.b16 %v862
    %v1386 = vunpack.c.l.b16 %v863
    %v1387 = vunpack.c.h.b16 %v863
    %v1388 = vunpack.c.l.b16 %v864
    %v1389 = vunpack.c.h.b16 %v864
    %v1390 = vunpack.c.l.b16 %v865
    %v1391 = vunpack.c.l.b16 %v866
    %v1392 = vunpack.c.h.b16 %v866
    %v1393 = vunpack.c.l.b16 %v867
    %v1394 = vunpack.c.h.b16 %v867
    %v1395 = vunpack.c.l.b16 %v868
    %v1396 = vunpack.c.l.b16 %v869
    %v1397 = vunpack.c.h.b16 %v869
    %v1398 = vunpack.c.l.b16 %v870
    %v1399 = vunpack.c.h.b16 %v870
    %v1400 = vunpack.c.l.b16 %v871
    %v1401 = vunpack.c.l.b16 %v872
    %v1402 = vunpack.c.h.b16 %v872
    %v1403 = vunpack.c.l.b16 %v873
    %v1404 = vunpack.c.h.b16 %v873
    %v1405 = vunpack.c.l.b16 %v874
    %v1406 = vunpack.c.l.b16 %v875
    %v1407 = vunpack.c.h.b16 %v875
    %v1408 = vunpack.c.l.b16 %v876
    %v1409 = vunpack.c.h.b16 %v876
    %v1410 = vunpack.c.l.b16 %v877
    %v1411 = vunpack.c.l.b16 %v878
    %v1412 = vunpack.c.h.b16 %v878
    %v1413 = vunpack.c.l.b16 %v879
    %v1414 = vunpack.c.h.b16 %v879
    %v1415 = vunpack.c.l.b16 %v880
    %v1416 = vunpack.c.l.b16 %v881
    %v1417 = vunpack.c.h.b16 %v881
    %v1418 = vunpack.c.l.b16 %v882
    %v1419 = vunpack.c.h.b16 %v882
    %v1420 = vunpack.c.l.b16 %v883
    %v1421 = vunpack.c.l.b16 %v884
    %v1422 = vunpack.c.h.b16 %v884
    %v1423 = vunpack.c.l.b16 %v885
    %v1424 = vunpack.c.h.b16 %v885
    %v1425 = vunpack.c.l.b16 %v886
    %v1426 = vpack.c.b16 %v1111, %v1106
    %v1427 = vpack.c.b16 %v1112, %v1107
    %v1428 = vpack.c.b16 %v1113, %v1108
    %v1429 = vpack.c.b16 %v1114, %v1109
    %v1430 = vpack.c.b16 %v1115, %v1110
    %v1431 = vpack.c.b16 %v1121, %v1116
    %v1432 = vpack.c.b16 %v1122, %v1117
    %v1433 = vpack.c.b16 %v1123, %v1118
    %v1434 = vpack.c.b16 %v1124, %v1119
    %v1435 = vpack.c.b16 %v1125, %v1120
    %v1436 = vpack.c.b16 %v1131, %v1126
    %v1437 = vpack.c.b16 %v1132, %v1127
    %v1438 = vpack.c.b16 %v1133, %v1128
    %v1439 = vpack.c.b16 %v1134, %v1129
    %v1440 = vpack.c.b16 %v1135, %v1130
    %v1441 = vpack.c.b16 %v1141, %v1136
    %v1442 = vpack.c.b16 %v1142, %v1137
    %v1443 = vpack.c.b16 %v1143, %v1138
    %v1444 = vpack.c.b16 %v1144, %v1139
    %v1445 = vpack.c.b16 %v1145, %v1140
    %v1446 = vpack.c.b16 %v1151, %v1146
    %v1447 = vpack.c.b16 %v1152, %v1147
    %v1448 = vpack.c.b16 %v1153, %v1148
    %v1449 = vpack.c.b16 %v1154, %v1149
    %v1450 = vpack.c.b16 %v1155, %v1150
    %v1451 = vpack.c.b16 %v1161, %v1156
    %v1452 = vpack.c.b16 %v1162, %v1157
    %v1453 = vpack.c.b16 %v1163, %v1158
    %v1454 = vpack.c.b16 %v1164, %v1159
    %v1455 = vpack.c.b16 %v1165, %v1160
    %v1456 = vpack.c.b16 %v1171, %v1166
    %v1457 = vpack.c.b16 %v1172, %v1167
    %v1458 = vpack.c.b16 %v1173, %v1168
    %v1459 = vpack.c.b16 %v1174, %v1169
    %v1460 = vpack.c.b16 %v1175, %v1170
    %v1461 = vpack.c.b16 %v1181, %v1176
    %v1462 = vpack.c.b16 %v1182, %v1177
    %v1463 = vpack.c.b16 %v1183, %v1178
    %v1464 = vpack.c.b16 %v1184, %v1179
    %v1465 = vpack.c.b16 %v1185, %v1180
    %v1466 = vpack.c.b16 %v1191, %v1186
    %v1467 = vpack.c.b16 %v1192, %v1187
    %v1468 = vpack.c.b16 %v1193, %v1188
    %v1469 = vpack.c.b16 %v1194, %v1189
    %v1470 = vpack.c.b16 %v1195, %v1190
    %v1471 = vpack.c.b16 %v1201, %v1196
    %v1472 = vpack.c.b16 %v1202, %v1197
    %v1473 = vpack.c.b16 %v1203, %v1198
    %v1474 = vpack.c.b16 %v1204, %v1199
    %v1475 = vpack.c.b16 %v1205, %v1200
    %v1476 = vpack.c.b16 %v1211, %v1206
    %v1477 = vpack.c.b16 %v1212, %v1207
    %v1478 = vpack.c.b16 %v1213, %v1208
    %v1479 = vpack.c.b16 %v1214, %v1209
    %v1480 = vpack.c.b16 %v1215, %v1210
    %v1481 = vpack.c.b16 %v1221, %v1216
    %v1482 = vpack.c.b16 %v1222, %v1217
    %v1483 = vpack.c.b16 %v1223, %v1218
    %v1484 = vpack.c.b16 %v1224, %v1219
    %v1485 = vpack.c.b16 %v1225, %v1220
    %v1486 = vpack.c.b16 %v1231, %v1226
    %v1487 = vpack.c.b16 %v1232, %v1227
    %v1488 = vpack.c.b16 %v1233, %v1228
    %v1489 = vpack.c.b16 %v1234, %v1229
    %v1490 = vpack.c.b16 %v1235, %v1230
    %v1491 = vpack.c.b16 %v1241, %v1236
    %v1492 = vpack.c.b16 %v1242, %v1237
    %v1493 = vpack.c.b16 %v1243, %v1238
    %v1494 = vpack.c.b16 %v1244, %v1239
    %v1495 = vpack.c.b16 %v1245, %v1240
    %v1496 = vpack.c.b16 %v1251, %v1246
    %v1497 = vpack.c.b16 %v1252, %v1247
    %v1498 = vpack.c.b16 %v1253, %v1248
    %v1499 = vpack.c.b16 %v1254, %v1249
    %v1500 = vpack.c.b16 %v1255, %v1250
    %v1501 = vpack.c.b16 %v1261, %v1256
    %v1502 = vpack.c.b16 %v1262, %v1257
    %v1503 = vpack.c.b16 %v1263, %v1258
    %v1504 = vpack.c.b16 %v1264, %v1259
    %v1505 = vpack.c.b16 %v1265, %v1260
    %v1506 = vpack.c.b16 %v1271, %v1266
    %v1507 = vpack.c.b16 %v1272, %v1267
    %v1508 = vpack.c.b16 %v1273, %v1268
    %v1509 = vpack.c.b16 %v1274, %v1269
    %v1510 = vpack.c.b16 %v1275, %v1270
    %v1511 = vpack.c.b16 %v1281, %v1276
    %v1512 = vpack.c.b16 %v1282, %v1277
    %v1513 = vpack.c.b16 %v1283, %v1278
    %v1514 = vpack.c.b16 %v1284, %v1279
    %v1515 = vpack.c.b16 %v1285, %v1280
    %v1516 = vpack.c.b16 %v1291, %v1286
    %v1517 = vpack.c.b16 %v1292, %v1287
    %v1518 = vpack.c.b16 %v1293, %v1288
    %v1519 = vpack.c.b16 %v1294, %v1289
    %v1520 = vpack.c.b16 %v1295, %v1290
    %v1521 = vpack.c.b16 %v1301, %v1296
    %v1522 = vpack.c.b16 %v1302, %v1297
    %v1523 = vpack.c.b16 %v1303, %v1298
    %v1524 = vpack.c.b16 %v1304, %v1299
    %v1525 = vpack.c.b16 %v1305, %v1300
    %v1526 = vpack.c.b16 %v1311, %v1306
    %v1527 = vpack.c.b16 %v1312, %v1307
    %v1528 = vpack.c.b16 %v1313, %v1308
    %v1529 = vpack.c.b16 %v1314, %v1309
    %v1530 = vpack.c.b16 %v1315, %v1310
    %v1531 = vpack.c.b16 %v1321, %v1316
    %v1532 = vpack.c.b16 %v1322, %v1317
    %v1533 = vpack.c.b16 %v1323, %v1318
    %v1534 = vpack.c.b16 %v1324, %v1319
    %v1535 = vpack.c.b16 %v1325, %v1320
    %v1536 = vpack.c.b16 %v1331, %v1326
    %v1537 = vpack.c.b16 %v1332, %v1327
    %v1538 = vpack.c.b16 %v1333, %v1328
    %v1539 = vpack.c.b16 %v1334, %v1329
    %v1540 = vpack.c.b16 %v1335, %v1330
    %v1541 = vpack.c.b16 %v1341, %v1336
    %v1542 = vpack.c.b16 %v1342, %v1337
    %v1543 = vpack.c.b16 %v1343, %v1338
    %v1544 = vpack.c.b16 %v1344, %v1339
    %v1545 = vpack.c.b16 %v1345, %v1340
    %v1546 = vpack.c.b16 %v1351, %v1346
    %v1547 = vpack.c.b16 %v1352, %v1347
    %v1548 = vpack.c.b16 %v1353, %v1348
    %v1549 = vpack.c.b16 %v1354, %v1349
    %v1550 = vpack.c.b16 %v1355, %v1350
    %v1551 = vpack.c.b16 %v1361, %v1356
    %v1552 = vpack.c.b16 %v1362, %v1357
    %v1553 = vpack.c.b16 %v1363, %v1358
    %v1554 = vpack.c.b16 %v1364, %v1359
    %v1555 = vpack.c.b16 %v1365, %v1360
    %v1556 = vpack.c.b16 %v1371, %v1366
    %v1557 = vpack.c.b16 %v1372, %v1367
    %v1558 = vpack.c.b16 %v1373, %v1368
    %v1559 = vpack.c.b16 %v1374, %v1369
    %v1560 = vpack.c.b16 %v1375, %v1370
    %v1561 = vpack.c.b16 %v1381, %v1376
    %v1562 = vpack.c.b16 %v1382, %v1377
    %v1563 = vpack.c.b16 %v1383, %v1378
    %v1564 = vpack.c.b16 %v1384, %v1379
    %v1565 = vpack.c.b16 %v1385, %v1380
    %v1566 = vpack.c.b16 %v1391, %v1386
    %v1567 = vpack.c.b16 %v1392, %v1387
    %v1568 = vpack.c.b16 %v1393, %v1388
    %v1569 = vpack.c.b16 %v1394, %v1389
    %v1570 = vpack.c.b16 %v1395, %v1390
    %v1571 = vpack.c.b16 %v1401, %v1396
    %v1572 = vpack.c.b16 %v1402, %v1397
    %v1573 = vpack.c.b16 %v1403, %v1398
    %v1574 = vpack.c.b16 %v1404, %v1399
    %v1575 = vpack.c.b16 %v1405, %v1400
    %v1576 = vpack.c.b16 %v1411, %v1406
    %v1577 = vpack.c.b16 %v1412, %v1407
    %v1578 = vpack.c.b16 %v1413, %v1408
    %v1579 = vpack.c.b16 %v1414, %v1409
    %v1580 = vpack.c.b16 %v1415, %v1410
    %v1581 = vpack.c.b16 %v1421, %v1416
    %v1582 = vpack.c.b16 %v1422, %v1417
    %v1583 = vpack.c.b16 %v1423, %v1418
    %v1584 = vpack.c.b16 %v1424, %v1419
    %v1585 = vpack.c.b16 %v1425, %v1420
    %1746 = vmatprep.subr.bf16.mxu0 %v1462
    %1747 = vmatpush1.bf16.msra.mxu0 %v1461
    %1748 = vmatprep.subr.bf16.mxu0 %v1457
    %1749 = vmatpush1.bf16.msra.mxu0 %v1456
    %1750 = vmatprep.subr.bf16.mxu0 %v1452
    %1751 = vmatpush1.bf16.msra.mxu0 %v1451
    %1752 = vmatprep.subr.bf16.mxu0 %v1447
    %1753 = vmatpush1.bf16.msra.mxu0 %v1446
    %1754 = vmatprep.subr.bf16.mxu0 %v1442
    %1755 = vmatpush1.bf16.msra.mxu0 %v1441
    %1756 = vmatprep.subr.bf16.mxu0 %v1437
    %1757 = vmatpush1.bf16.msra.mxu0 %v1436
    %1758 = vmatprep.subr.bf16.mxu0 %v1432
    %1759 = vmatpush1.bf16.msra.mxu0 %v1431
    %1760 = vmatprep.subr.bf16.mxu0 %v1427
    %1761 = vmatpush1.bf16.msra.mxu0 %v1426
    %1762 = vmatprep.subr.bf16.mxu0 %v1502
    %1763 = vmatpush2.bf16.msra.mxu0 %v1501
    %1764 = vmatprep.subr.bf16.mxu0 %v1497
    %1765 = vmatpush2.bf16.msra.mxu0 %v1496
    %1766 = vmatprep.subr.bf16.mxu0 %v1492
    %1767 = vmatpush2.bf16.msra.mxu0 %v1491
    %1768 = vmatprep.subr.bf16.mxu0 %v1487
    %1769 = vmatpush2.bf16.msra.mxu0 %v1486
    %1770 = vmatprep.subr.bf16.mxu0 %v1482
    %1771 = vmatpush2.bf16.msra.mxu0 %v1481
    %1772 = vmatprep.subr.bf16.mxu0 %v1477
    %1773 = vmatpush2.bf16.msra.mxu0 %v1476
    %1774 = vmatprep.subr.bf16.mxu0 %v1472
    %1775 = vmatpush2.bf16.msra.mxu0 %v1471
    %1776 = vmatprep.subr.bf16.mxu0 %v1467
    %1777 = vmatpush2.bf16.msra.mxu0 %v1466
    %1778 = vmatprep.mubr.bf16.mxu0 %v692
    %1779 = vmatmul.mubr.bf16.gmra.mxu0 %v691
    %v1780 = vpop.f32.mrf.mxu0
    %v1781 = vadd.f32 %v892, %v1780
    %v1782 = vpop.f32.mrf.mxu0
    %v1783 = vadd.f32 %v896, %v1782
    %v1784 = vpop.f32.mrf.mxu0
    %v1785 = vpop.f32.mrf.mxu0
    %1786 = vdwg.mxu0
    %1787 = vmatprep.subr.bf16.mxu0 %v1542
    %1788 = vmatpush1.bf16.msra.mxu0 %v1541
    %1789 = vmatprep.subr.bf16.mxu0 %v1537
    %1790 = vmatpush1.bf16.msra.mxu0 %v1536
    %1791 = vmatprep.subr.bf16.mxu0 %v1532
    %1792 = vmatpush1.bf16.msra.mxu0 %v1531
    %1793 = vmatprep.subr.bf16.mxu0 %v1527
    %1794 = vmatpush1.bf16.msra.mxu0 %v1526
    %1795 = vmatprep.subr.bf16.mxu0 %v1522
    %1796 = vmatpush1.bf16.msra.mxu0 %v1521
    %1797 = vmatprep.subr.bf16.mxu0 %v1517
    %1798 = vmatpush1.bf16.msra.mxu0 %v1516
    %1799 = vmatprep.subr.bf16.mxu0 %v1512
    %1800 = vmatpush1.bf16.msra.mxu0 %v1511
    %1801 = vmatprep.subr.bf16.mxu0 %v1507
    %1802 = vmatpush1.bf16.msra.mxu0 %v1506
    %1803 = vmatprep.subr.bf16.mxu0 %v1582
    %1804 = vmatpush2.bf16.msra.mxu0 %v1581
    %1805 = vmatprep.subr.bf16.mxu0 %v1577
    %1806 = vmatpush2.bf16.msra.mxu0 %v1576
    %1807 = vmatprep.subr.bf16.mxu0 %v1572
    %1808 = vmatpush2.bf16.msra.mxu0 %v1571
    %1809 = vmatprep.subr.bf16.mxu0 %v1567
    %1810 = vmatpush2.bf16.msra.mxu0 %v1566
    %1811 = vmatprep.subr.bf16.mxu0 %v1562
    %1812 = vmatpush2.bf16.msra.mxu0 %v1561
    %1813 = vmatprep.subr.bf16.mxu0 %v1557
    %1814 = vmatpush2.bf16.msra.mxu0 %v1556
    %1815 = vmatprep.subr.bf16.mxu0 %v1552
    %1816 = vmatpush2.bf16.msra.mxu0 %v1551
    %1817 = vmatprep.subr.bf16.mxu0 %v1547
    %1818 = vmatpush2.bf16.msra.mxu0 %v1546
    %1819 = vmatprep.mubr.bf16.mxu0 %v694
    %1820 = vmatmul.mubr.bf16.gmra.mxu0 %v693
    %v1821 = vpop.f32.mrf.mxu0
    %v1822 = vadd.f32 %v1781, %v1821
    %v1823 = vpop.f32.mrf.mxu0
    %v1824 = vadd.f32 %v1783, %v1823
    %v1825 = vpop.f32.mrf.mxu0
    %v1826 = vpop.f32.mrf.mxu0
    %1827 = vdwg.mxu0
    %1828 = vmatprep.subr.bf16.mxu0 %v1464
    %1829 = vmatpush1.bf16.msra.mxu0 %v1463
    %1830 = vmatprep.subr.bf16.mxu0 %v1459
    %1831 = vmatpush1.bf16.msra.mxu0 %v1458
    %1832 = vmatprep.subr.bf16.mxu0 %v1454
    %1833 = vmatpush1.bf16.msra.mxu0 %v1453
    %1834 = vmatprep.subr.bf16.mxu0 %v1449
    %1835 = vmatpush1.bf16.msra.mxu0 %v1448
    %1836 = vmatprep.subr.bf16.mxu0 %v1444
    %1837 = vmatpush1.bf16.msra.mxu0 %v1443
    %1838 = vmatprep.subr.bf16.mxu0 %v1439
    %1839 = vmatpush1.bf16.msra.mxu0 %v1438
    %1840 = vmatprep.subr.bf16.mxu0 %v1434
    %1841 = vmatpush1.bf16.msra.mxu0 %v1433
    %1842 = vmatprep.subr.bf16.mxu0 %v1429
    %1843 = vmatpush1.bf16.msra.mxu0 %v1428
    %1844 = vmatprep.subr.bf16.mxu0 %v1504
    %1845 = vmatpush2.bf16.msra.mxu0 %v1503
    %1846 = vmatprep.subr.bf16.mxu0 %v1499
    %1847 = vmatpush2.bf16.msra.mxu0 %v1498
    %1848 = vmatprep.subr.bf16.mxu0 %v1494
    %1849 = vmatpush2.bf16.msra.mxu0 %v1493
    %1850 = vmatprep.subr.bf16.mxu0 %v1489
    %1851 = vmatpush2.bf16.msra.mxu0 %v1488
    %1852 = vmatprep.subr.bf16.mxu0 %v1484
    %1853 = vmatpush2.bf16.msra.mxu0 %v1483
    %1854 = vmatprep.subr.bf16.mxu0 %v1479
    %1855 = vmatpush2.bf16.msra.mxu0 %v1478
    %1856 = vmatprep.subr.bf16.mxu0 %v1474
    %1857 = vmatpush2.bf16.msra.mxu0 %v1473
    %1858 = vmatprep.subr.bf16.mxu0 %v1469
    %1859 = vmatpush2.bf16.msra.mxu0 %v1468
    %1860 = vmatprep.mubr.bf16.mxu0 %v692
    %1861 = vmatmul.mubr.bf16.gmra.mxu0 %v691
    %v1862 = vpop.f32.mrf.mxu0
    %v1863 = vadd.f32 %v900, %v1862
    %v1864 = vpop.f32.mrf.mxu0
    %v1865 = vadd.f32 %v904, %v1864
    %v1866 = vpop.f32.mrf.mxu0
    %v1867 = vpop.f32.mrf.mxu0
    %1868 = vdwg.mxu0
    %1869 = vmatprep.subr.bf16.mxu0 %v1544
    %1870 = vmatpush1.bf16.msra.mxu0 %v1543
    %1871 = vmatprep.subr.bf16.mxu0 %v1539
    %1872 = vmatpush1.bf16.msra.mxu0 %v1538
    %1873 = vmatprep.subr.bf16.mxu0 %v1534
    %1874 = vmatpush1.bf16.msra.mxu0 %v1533
    %1875 = vmatprep.subr.bf16.mxu0 %v1529
    %1876 = vmatpush1.bf16.msra.mxu0 %v1528
    %1877 = vmatprep.subr.bf16.mxu0 %v1524
    %1878 = vmatpush1.bf16.msra.mxu0 %v1523
    %1879 = vmatprep.subr.bf16.mxu0 %v1519
    %1880 = vmatpush1.bf16.msra.mxu0 %v1518
    %1881 = vmatprep.subr.bf16.mxu0 %v1514
    %1882 = vmatpush1.bf16.msra.mxu0 %v1513
    %1883 = vmatprep.subr.bf16.mxu0 %v1509
    %1884 = vmatpush1.bf16.msra.mxu0 %v1508
    %1885 = vmatprep.subr.bf16.mxu0 %v1584
    %1886 = vmatpush2.bf16.msra.mxu0 %v1583
    %1887 = vmatprep.subr.bf16.mxu0 %v1579
    %1888 = vmatpush2.bf16.msra.mxu0 %v1578
    %1889 = vmatprep.subr.bf16.mxu0 %v1574
    %1890 = vmatpush2.bf16.msra.mxu0 %v1573
    %1891 = vmatprep.subr.bf16.mxu0 %v1569
    %1892 = vmatpush2.bf16.msra.mxu0 %v1568
    %1893 = vmatprep.subr.bf16.mxu0 %v1564
    %1894 = vmatpush2.bf16.msra.mxu0 %v1563
    %1895 = vmatprep.subr.bf16.mxu0 %v1559
    %1896 = vmatpush2.bf16.msra.mxu0 %v1558
    %1897 = vmatprep.subr.bf16.mxu0 %v1554
    %1898 = vmatpush2.bf16.msra.mxu0 %v1553
    %1899 = vmatprep.subr.bf16.mxu0 %v1549
    %1900 = vmatpush2.bf16.msra.mxu0 %v1548
    %1901 = vmatprep.mubr.bf16.mxu0 %v694
    %1902 = vmatmul.mubr.bf16.gmra.mxu0 %v693
    %v1903 = vpop.f32.mrf.mxu0
    %v1904 = vadd.f32 %v1863, %v1903
    %v1905 = vpop.f32.mrf.mxu0
    %v1906 = vadd.f32 %v1865, %v1905
    %v1907 = vpop.f32.mrf.mxu0
    %v1908 = vpop.f32.mrf.mxu0
    %1909 = vdwg.mxu0
    %1910 = vmatprep.subr.bf16.mxu0 0
    %1911 = vmatpush1.bf16.msra.mxu0 %v1465
    %1912 = vmatprep.subr.bf16.mxu0 0
    %1913 = vmatpush1.bf16.msra.mxu0 %v1460
    %1914 = vmatprep.subr.bf16.mxu0 0
    %1915 = vmatpush1.bf16.msra.mxu0 %v1455
    %1916 = vmatprep.subr.bf16.mxu0 0
    %1917 = vmatpush1.bf16.msra.mxu0 %v1450
    %1918 = vmatprep.subr.bf16.mxu0 0
    %1919 = vmatpush1.bf16.msra.mxu0 %v1445
    %1920 = vmatprep.subr.bf16.mxu0 0
    %1921 = vmatpush1.bf16.msra.mxu0 %v1440
    %1922 = vmatprep.subr.bf16.mxu0 0
    %1923 = vmatpush1.bf16.msra.mxu0 %v1435
    %1924 = vmatprep.subr.bf16.mxu0 0
    %1925 = vmatpush1.bf16.msra.mxu0 %v1430
    %1926 = vmatprep.subr.bf16.mxu0 0
    %1927 = vmatpush2.bf16.msra.mxu0 %v1505
    %1928 = vmatprep.subr.bf16.mxu0 0
    %1929 = vmatpush2.bf16.msra.mxu0 %v1500
    %1930 = vmatprep.subr.bf16.mxu0 0
    %1931 = vmatpush2.bf16.msra.mxu0 %v1495
    %1932 = vmatprep.subr.bf16.mxu0 0
    %1933 = vmatpush2.bf16.msra.mxu0 %v1490
    %1934 = vmatprep.subr.bf16.mxu0 0
    %1935 = vmatpush2.bf16.msra.mxu0 %v1485
    %1936 = vmatprep.subr.bf16.mxu0 0
    %1937 = vmatpush2.bf16.msra.mxu0 %v1480
    %1938 = vmatprep.subr.bf16.mxu0 0
    %1939 = vmatpush2.bf16.msra.mxu0 %v1475
    %1940 = vmatprep.subr.bf16.mxu0 0
    %1941 = vmatpush2.bf16.msra.mxu0 %v1470
    %1942 = vmatprep.mubr.bf16.mxu0 %v692
    %1943 = vmatmul.mubr.bf16.gmra.mxu0 %v691
    %v1944 = vpop.f32.mrf.mxu0
    %v1945 = vadd.f32 %v908, %v1944
    %v1946 = vpop.f32.mrf.mxu0
    %v1947 = vpop.f32.mrf.mxu0
    %v1948 = vpop.f32.mrf.mxu0
    %1949 = vdwg.mxu0
    %1950 = vmatprep.subr.bf16.mxu0 0
    %1951 = vmatpush1.bf16.msra.mxu0 %v1545
    %1952 = vmatprep.subr.bf16.mxu0 0
    %1953 = vmatpush1.bf16.msra.mxu0 %v1540
    %1954 = vmatprep.subr.bf16.mxu0 0
    %1955 = vmatpush1.bf16.msra.mxu0 %v1535
    %1956 = vmatprep.subr.bf16.mxu0 0
    %1957 = vmatpush1.bf16.msra.mxu0 %v1530
    %1958 = vmatprep.subr.bf16.mxu0 0
    %1959 = vmatpush1.bf16.msra.mxu0 %v1525
    %1960 = vmatprep.subr.bf16.mxu0 0
    %1961 = vmatpush1.bf16.msra.mxu0 %v1520
    %1962 = vmatprep.subr.bf16.mxu0 0
    %1963 = vmatpush1.bf16.msra.mxu0 %v1515
    %1964 = vmatprep.subr.bf16.mxu0 0
    %1965 = vmatpush1.bf16.msra.mxu0 %v1510
    %1966 = vmatprep.subr.bf16.mxu0 0
    %1967 = vmatpush2.bf16.msra.mxu0 %v1585
    %1968 = vmatprep.subr.bf16.mxu0 0
    %1969 = vmatpush2.bf16.msra.mxu0 %v1580
    %1970 = vmatprep.subr.bf16.mxu0 0
    %1971 = vmatpush2.bf16.msra.mxu0 %v1575
    %1972 = vmatprep.subr.bf16.mxu0 0
    %1973 = vmatpush2.bf16.msra.mxu0 %v1570
    %1974 = vmatprep.subr.bf16.mxu0 0
    %1975 = vmatpush2.bf16.msra.mxu0 %v1565
    %1976 = vmatprep.subr.bf16.mxu0 0
    %1977 = vmatpush2.bf16.msra.mxu0 %v1560
    %1978 = vmatprep.subr.bf16.mxu0 0
    %1979 = vmatpush2.bf16.msra.mxu0 %v1555
    %1980 = vmatprep.subr.bf16.mxu0 0
    %1981 = vmatpush2.bf16.msra.mxu0 %v1550
    %1982 = vmatprep.mubr.bf16.mxu0 %v694
    %1983 = vmatmul.mubr.bf16.gmra.mxu0 %v693
    %v1984 = vpop.f32.mrf.mxu0
    %v1985 = vadd.f32 %v1945, %v1984
    %v1986 = vpop.f32.mrf.mxu0
    %v1987 = vpop.f32.mrf.mxu0
    %v1988 = vpop.f32.mrf.mxu0
    %1989 = vdwg.mxu0
    %v1990 = vmax.f32 %v1822, 0.0
    %v1991 = vmax.f32 %v1824, 0.0
    %v1992 = vmax.f32 %v1904, 0.0
    %v1993 = vmax.f32 %v1906, 0.0
    %v1994 = vmax.f32 %v1985, 0.0
    %v1995 = vpack.c.bf16 %v1990, %v1990
    %v1996 = vpack.c.bf16 %v1991, %v1991
    %v1997 = vpack.c.bf16 %v1992, %v1992
    %v1998 = vpack.c.bf16 %v1993, %v1993
    %v1999 = vpack.c.bf16 %v1994, %v1994
    %v2000 = vld [vmem:[#allocation11] sm:$0xf]
    %v2001 = vld [vmem:[#allocation11 + $0x4] sm:$0xf]
    %v2002 = vld [vmem:[#allocation11 + $0x8] sm:$0xf]
    %v2003 = vld [vmem:[#allocation11 + $0xc] sm:$0xf]
    %v2004 = vld [vmem:[#allocation11 + $0x10] sm:$0xf]
    %v2005 = vld [vmem:[#allocation11 + $0x14] sm:$0xf]
    %v2006 = vld [vmem:[#allocation11 + $0x18] sm:$0xf]
    %v2007 = vld [vmem:[#allocation11 + $0x1c] sm:$0xf]
    %v2008 = vld [vmem:[#allocation11 + $0x20] sm:$0xf]
    %v2009 = vld [vmem:[#allocation11 + $0x24] sm:$0xf]
    %v2010 = vld [vmem:[#allocation11 + $0x28] sm:$0xf]
    %v2011 = vld [vmem:[#allocation11 + $0x2c] sm:$0xf]
    %v2012 = vld [vmem:[#allocation11 + $0x30] sm:$0xf]
    %v2013 = vld [vmem:[#allocation11 + $0x34] sm:$0xf]
    %v2014 = vld [vmem:[#allocation11 + $0x38] sm:$0xf]
    %v2015 = vld [vmem:[#allocation11 + $0x3c] sm:$0xf]
    %v2016 = vld [vmem:[#allocation11 + $0x40] sm:$0xf]
    %v2017 = vld [vmem:[#allocation11 + $0x44] sm:$0xf]
    %v2018 = vld [vmem:[#allocation11 + $0x48] sm:$0xf]
    %v2019 = vld [vmem:[#allocation11 + $0x4c] sm:$0xf]
    %v2020 = vld [vmem:[#allocation11 + $0x50] sm:$0xf]
    %v2021 = vld [vmem:[#allocation11 + $0x54] sm:$0xf]
    %v2022 = vld [vmem:[#allocation11 + $0x58] sm:$0xf]
    %v2023 = vld [vmem:[#allocation11 + $0x5c] sm:$0xf]
    %v2024 = vld [vmem:[#allocation11 + $0x60] sm:$0xf]
    %v2025 = vld [vmem:[#allocation11 + $0x64] sm:$0xf]
    %v2026 = vld [vmem:[#allocation11 + $0x68] sm:$0xf]
    %v2027 = vld [vmem:[#allocation11 + $0x6c] sm:$0xf]
    %v2028 = vld [vmem:[#allocation11 + $0x70] sm:$0xf]
    %v2029 = vld [vmem:[#allocation11 + $0x74] sm:$0xf]
    %v2030 = vld [vmem:[#allocation11 + $0x78] sm:$0xf]
    %v2031 = vld [vmem:[#allocation11 + $0x7c] sm:$0xf]
    %v2032 = vld [vmem:[#allocation11 + $0x80] sm:$0xf]
    %v2033 = vld [vmem:[#allocation11 + $0x84] sm:$0xf]
    %v2034 = vld [vmem:[#allocation11 + $0x88] sm:$0xf]
    %v2035 = vld [vmem:[#allocation11 + $0x8c] sm:$0xf]
    %v2036 = vld [vmem:[#allocation11 + $0x90] sm:$0xf]
    %v2037 = vld [vmem:[#allocation11 + $0x94] sm:$0xf]
    %v2038 = vld [vmem:[#allocation11 + $0x98] sm:$0xf]
    %v2039 = vld [vmem:[#allocation11 + $0x9c] sm:$0xf]
    %v2040 = vld [vmem:[#allocation11 + $0xa0] sm:$0xf]
    %v2041 = vld [vmem:[#allocation11 + $0xa4] sm:$0xf]
    %v2042 = vld [vmem:[#allocation11 + $0xa8] sm:$0xf]
    %v2043 = vld [vmem:[#allocation11 + $0xac] sm:$0xf]
    %v2044 = vld [vmem:[#allocation11 + $0xb0] sm:$0xf]
    %v2045 = vld [vmem:[#allocation11 + $0xb4] sm:$0xf]
    %v2046 = vld [vmem:[#allocation11 + $0xb8] sm:$0xf]
    %v2047 = vld [vmem:[#allocation11 + $0xbc] sm:$0xf]
    %v2048 = vld [vmem:[#allocation11 + $0xc0] sm:$0xf]
    %v2049 = vld [vmem:[#allocation11 + $0xc4] sm:$0xf]
    %v2050 = vld [vmem:[#allocation11 + $0xc8] sm:$0xf]
    %v2051 = vld [vmem:[#allocation11 + $0xcc] sm:$0xf]
    %v2052 = vld [vmem:[#allocation11 + $0xd0] sm:$0xf]
    %v2053 = vld [vmem:[#allocation11 + $0xd4] sm:$0xf]
    %v2054 = vld [vmem:[#allocation11 + $0xd8] sm:$0xf]
    %v2055 = vld [vmem:[#allocation11 + $0xdc] sm:$0xf]
    %v2056 = vld [vmem:[#allocation11 + $0xe0] sm:$0xf]
    %v2057 = vld [vmem:[#allocation11 + $0xe4] sm:$0xf]
    %v2058 = vld [vmem:[#allocation11 + $0xe8] sm:$0xf]
    %v2059 = vld [vmem:[#allocation11 + $0xec] sm:$0xf]
    %v2060 = vld [vmem:[#allocation11 + $0xf0] sm:$0xf]
    %v2061 = vld [vmem:[#allocation11 + $0xf4] sm:$0xf]
    %v2062 = vld [vmem:[#allocation11 + $0xf8] sm:$0xf]
    %v2063 = vld [vmem:[#allocation11 + $0xfc] sm:$0xf]
    %v2064 = vld [vmem:[#allocation11 + $0x100] sm:$0xf]
    %v2065 = vld [vmem:[#allocation11 + $0x104] sm:$0xf]
    %v2066 = vld [vmem:[#allocation11 + $0x108] sm:$0xf]
    %v2067 = vld [vmem:[#allocation11 + $0x10c] sm:$0xf]
    %v2068 = vld [vmem:[#allocation11 + $0x110] sm:$0xf]
    %v2069 = vld [vmem:[#allocation11 + $0x114] sm:$0xf]
    %v2070 = vld [vmem:[#allocation11 + $0x118] sm:$0xf]
    %v2071 = vld [vmem:[#allocation11 + $0x11c] sm:$0xf]
    %v2072 = vld [vmem:[#allocation11 + $0x120] sm:$0xf]
    %v2073 = vld [vmem:[#allocation11 + $0x124] sm:$0xf]
    %v2074 = vld [vmem:[#allocation11 + $0x128] sm:$0xf]
    %v2075 = vld [vmem:[#allocation11 + $0x12c] sm:$0xf]
    %v2076 = vld [vmem:[#allocation11 + $0x130] sm:$0xf]
    %v2077 = vld [vmem:[#allocation11 + $0x134] sm:$0xf]
    %v2078 = vld [vmem:[#allocation11 + $0x138] sm:$0xf]
    %v2079 = vld [vmem:[#allocation11 + $0x13c] sm:$0xf]
    %v2080 = vld [vmem:[%s8] sm:$0x1]
    %v2082 = vlaneseq
    %v2083 = vshrl.u32 %v2082, 7
    %v2084 = vsub.s32 0, %v2083
    %v2085 = vrot.slane %v2080, %v2084
    %v2167 = vunpack.c.l.b16 %v2000
    %v2168 = vunpack.c.l.b16 %v2001
    %v2169 = vunpack.c.l.b16 %v2002
    %v2170 = vunpack.c.l.b16 %v2003
    %v2171 = vunpack.c.l.b16 %v2004
    %v2172 = vunpack.c.l.b16 %v2005
    %v2173 = vunpack.c.l.b16 %v2006
    %v2174 = vunpack.c.l.b16 %v2007
    %v2175 = vunpack.c.l.b16 %v2008
    %v2176 = vunpack.c.l.b16 %v2009
    %v2177 = vunpack.c.l.b16 %v2010
    %v2178 = vunpack.c.l.b16 %v2011
    %v2179 = vunpack.c.l.b16 %v2012
    %v2180 = vunpack.c.l.b16 %v2013
    %v2181 = vunpack.c.l.b16 %v2014
    %v2182 = vunpack.c.l.b16 %v2015
    %v2183 = vunpack.c.l.b16 %v2016
    %v2184 = vunpack.c.l.b16 %v2017
    %v2185 = vunpack.c.l.b16 %v2018
    %v2186 = vunpack.c.l.b16 %v2019
    %v2187 = vunpack.c.l.b16 %v2020
    %v2188 = vunpack.c.l.b16 %v2021
    %v2189 = vunpack.c.l.b16 %v2022
    %v2190 = vunpack.c.l.b16 %v2023
    %v2191 = vunpack.c.l.b16 %v2024
    %v2192 = vunpack.c.l.b16 %v2025
    %v2193 = vunpack.c.l.b16 %v2026
    %v2194 = vunpack.c.l.b16 %v2027
    %v2195 = vunpack.c.l.b16 %v2028
    %v2196 = vunpack.c.l.b16 %v2029
    %v2197 = vunpack.c.l.b16 %v2030
    %v2198 = vunpack.c.l.b16 %v2031
    %v2199 = vunpack.c.l.b16 %v2032
    %v2200 = vunpack.c.l.b16 %v2033
    %v2201 = vunpack.c.l.b16 %v2034
    %v2202 = vunpack.c.l.b16 %v2035
    %v2203 = vunpack.c.l.b16 %v2036
    %v2204 = vunpack.c.l.b16 %v2037
    %v2205 = vunpack.c.l.b16 %v2038
    %v2206 = vunpack.c.l.b16 %v2039
    %v2207 = vunpack.c.l.b16 %v2040
    %v2208 = vunpack.c.l.b16 %v2041
    %v2209 = vunpack.c.l.b16 %v2042
    %v2210 = vunpack.c.l.b16 %v2043
    %v2211 = vunpack.c.l.b16 %v2044
    %v2212 = vunpack.c.l.b16 %v2045
    %v2213 = vunpack.c.l.b16 %v2046
    %v2214 = vunpack.c.l.b16 %v2047
    %v2215 = vunpack.c.l.b16 %v2048
    %v2216 = vunpack.c.l.b16 %v2049
    %v2217 = vunpack.c.l.b16 %v2050
    %v2218 = vunpack.c.l.b16 %v2051
    %v2219 = vunpack.c.l.b16 %v2052
    %v2220 = vunpack.c.l.b16 %v2053
    %v2221 = vunpack.c.l.b16 %v2054
    %v2222 = vunpack.c.l.b16 %v2055
    %v2223 = vunpack.c.l.b16 %v2056
    %v2224 = vunpack.c.l.b16 %v2057
    %v2225 = vunpack.c.l.b16 %v2058
    %v2226 = vunpack.c.l.b16 %v2059
    %v2227 = vunpack.c.l.b16 %v2060
    %v2228 = vunpack.c.l.b16 %v2061
    %v2229 = vunpack.c.l.b16 %v2062
    %v2230 = vunpack.c.l.b16 %v2063
    %v2231 = vunpack.c.l.b16 %v2064
    %v2232 = vunpack.c.l.b16 %v2065
    %v2233 = vunpack.c.l.b16 %v2066
    %v2234 = vunpack.c.l.b16 %v2067
    %v2235 = vunpack.c.l.b16 %v2068
    %v2236 = vunpack.c.l.b16 %v2069
    %v2237 = vunpack.c.l.b16 %v2070
    %v2238 = vunpack.c.l.b16 %v2071
    %v2239 = vunpack.c.l.b16 %v2072
    %v2240 = vunpack.c.l.b16 %v2073
    %v2241 = vunpack.c.l.b16 %v2074
    %v2242 = vunpack.c.l.b16 %v2075
    %v2243 = vunpack.c.l.b16 %v2076
    %v2244 = vunpack.c.l.b16 %v2077
    %v2245 = vunpack.c.l.b16 %v2078
    %v2246 = vunpack.c.l.b16 %v2079
    %v2247 = vpack.c.b16 %v2168, %v2167
    %v2248 = vpack.c.b16 %v2170, %v2169
    %v2249 = vpack.c.b16 %v2172, %v2171
    %v2250 = vpack.c.b16 %v2174, %v2173
    %v2251 = vpack.c.b16 %v2176, %v2175
    %v2252 = vpack.c.b16 %v2178, %v2177
    %v2253 = vpack.c.b16 %v2180, %v2179
    %v2254 = vpack.c.b16 %v2182, %v2181
    %v2255 = vpack.c.b16 %v2184, %v2183
    %v2256 = vpack.c.b16 %v2186, %v2185
    %v2257 = vpack.c.b16 %v2188, %v2187
    %v2258 = vpack.c.b16 %v2190, %v2189
    %v2259 = vpack.c.b16 %v2192, %v2191
    %v2260 = vpack.c.b16 %v2194, %v2193
    %v2261 = vpack.c.b16 %v2196, %v2195
    %v2262 = vpack.c.b16 %v2198, %v2197
    %v2263 = vpack.c.b16 %v2200, %v2199
    %v2264 = vpack.c.b16 %v2202, %v2201
    %v2265 = vpack.c.b16 %v2204, %v2203
    %v2266 = vpack.c.b16 %v2206, %v2205
    %v2267 = vpack.c.b16 %v2208, %v2207
    %v2268 = vpack.c.b16 %v2210, %v2209
    %v2269 = vpack.c.b16 %v2212, %v2211
    %v2270 = vpack.c.b16 %v2214, %v2213
    %v2271 = vpack.c.b16 %v2216, %v2215
    %v2272 = vpack.c.b16 %v2218, %v2217
    %v2273 = vpack.c.b16 %v2220, %v2219
    %v2274 = vpack.c.b16 %v2222, %v2221
    %v2275 = vpack.c.b16 %v2224, %v2223
    %v2276 = vpack.c.b16 %v2226, %v2225
    %v2277 = vpack.c.b16 %v2228, %v2227
    %v2278 = vpack.c.b16 %v2230, %v2229
    %v2279 = vpack.c.b16 %v2232, %v2231
    %v2280 = vpack.c.b16 %v2234, %v2233
    %v2281 = vpack.c.b16 %v2236, %v2235
    %v2282 = vpack.c.b16 %v2238, %v2237
    %v2283 = vpack.c.b16 %v2240, %v2239
    %v2284 = vpack.c.b16 %v2242, %v2241
    %v2285 = vpack.c.b16 %v2244, %v2243
    %v2286 = vpack.c.b16 %v2246, %v2245
    %2327 = vmatprep.subr.bf16.mxu0 0
    %2328 = vmatpush1.bf16.msra.mxu0 %v2254
    %2329 = vmatprep.subr.bf16.mxu0 0
    %2330 = vmatpush1.bf16.msra.mxu0 %v2253
    %2331 = vmatprep.subr.bf16.mxu0 0
    %2332 = vmatpush1.bf16.msra.mxu0 %v2252
    %2333 = vmatprep.subr.bf16.mxu0 0
    %2334 = vmatpush1.bf16.msra.mxu0 %v2251
    %2335 = vmatprep.subr.bf16.mxu0 0
    %2336 = vmatpush1.bf16.msra.mxu0 %v2250
    %2337 = vmatprep.subr.bf16.mxu0 0
    %2338 = vmatpush1.bf16.msra.mxu0 %v2249
    %2339 = vmatprep.subr.bf16.mxu0 0
    %2340 = vmatpush1.bf16.msra.mxu0 %v2248
    %2341 = vmatprep.subr.bf16.mxu0 0
    %2342 = vmatpush1.bf16.msra.mxu0 %v2247
    %2343 = vmatprep.subr.bf16.mxu0 0
    %2344 = vmatpush2.bf16.msra.mxu0 %v2262
    %2345 = vmatprep.subr.bf16.mxu0 0
    %2346 = vmatpush2.bf16.msra.mxu0 %v2261
    %2347 = vmatprep.subr.bf16.mxu0 0
    %2348 = vmatpush2.bf16.msra.mxu0 %v2260
    %2349 = vmatprep.subr.bf16.mxu0 0
    %2350 = vmatpush2.bf16.msra.mxu0 %v2259
    %2351 = vmatprep.subr.bf16.mxu0 0
    %2352 = vmatpush2.bf16.msra.mxu0 %v2258
    %2353 = vmatprep.subr.bf16.mxu0 0
    %2354 = vmatpush2.bf16.msra.mxu0 %v2257
    %2355 = vmatprep.subr.bf16.mxu0 0
    %2356 = vmatpush2.bf16.msra.mxu0 %v2256
    %2357 = vmatprep.subr.bf16.mxu0 0
    %2358 = vmatpush2.bf16.msra.mxu0 %v2255
    %2359 = vmatprep.mubr.bf16.mxu0 %v1996
    %2360 = vmatmul.mubr.bf16.gmra.mxu0 %v1995
    %v2361 = vpop.f32.mrf.mxu0
    %v2362 = vadd.f32 %v2085, %v2361
    %v2363 = vpop.f32.mrf.mxu0
    %v2364 = vpop.f32.mrf.mxu0
    %v2365 = vpop.f32.mrf.mxu0
    %2366 = vdwg.mxu0
    %2367 = vmatprep.subr.bf16.mxu0 0
    %2368 = vmatpush1.bf16.msra.mxu0 %v2270
    %2369 = vmatprep.subr.bf16.mxu0 0
    %2370 = vmatpush1.bf16.msra.mxu0 %v2269
    %2371 = vmatprep.subr.bf16.mxu0 0
    %2372 = vmatpush1.bf16.msra.mxu0 %v2268
    %2373 = vmatprep.subr.bf16.mxu0 0
    %2374 = vmatpush1.bf16.msra.mxu0 %v2267
    %2375 = vmatprep.subr.bf16.mxu0 0
    %2376 = vmatpush1.bf16.msra.mxu0 %v2266
    %2377 = vmatprep.subr.bf16.mxu0 0
    %2378 = vmatpush1.bf16.msra.mxu0 %v2265
    %2379 = vmatprep.subr.bf16.mxu0 0
    %2380 = vmatpush1.bf16.msra.mxu0 %v2264
    %2381 = vmatprep.subr.bf16.mxu0 0
    %2382 = vmatpush1.bf16.msra.mxu0 %v2263
    %2383 = vmatprep.subr.bf16.mxu0 0
    %2384 = vmatpush2.bf16.msra.mxu0 %v2278
    %2385 = vmatprep.subr.bf16.mxu0 0
    %2386 = vmatpush2.bf16.msra.mxu0 %v2277
    %2387 = vmatprep.subr.bf16.mxu0 0
    %2388 = vmatpush2.bf16.msra.mxu0 %v2276
    %2389 = vmatprep.subr.bf16.mxu0 0
    %2390 = vmatpush2.bf16.msra.mxu0 %v2275
    %2391 = vmatprep.subr.bf16.mxu0 0
    %2392 = vmatpush2.bf16.msra.mxu0 %v2274
    %2393 = vmatprep.subr.bf16.mxu0 0
    %2394 = vmatpush2.bf16.msra.mxu0 %v2273
    %2395 = vmatprep.subr.bf16.mxu0 0
    %2396 = vmatpush2.bf16.msra.mxu0 %v2272
    %2397 = vmatprep.subr.bf16.mxu0 0
    %2398 = vmatpush2.bf16.msra.mxu0 %v2271
    %2399 = vmatprep.mubr.bf16.mxu0 %v1998
    %2400 = vmatmul.mubr.bf16.gmra.mxu0 %v1997
    %v2401 = vpop.f32.mrf.mxu0
    %v2402 = vadd.f32 %v2362, %v2401
    %v2403 = vpop.f32.mrf.mxu0
    %v2404 = vpop.f32.mrf.mxu0
    %v2405 = vpop.f32.mrf.mxu0
    %2406 = vdwg.mxu0
    %2407 = vmatprep.subr.bf16.mxu0 0
    %2408 = vmatpush1.bf16.msra.mxu0 %v2286
    %2409 = vmatprep.subr.bf16.mxu0 0
    %2410 = vmatpush1.bf16.msra.mxu0 %v2285
    %2411 = vmatprep.subr.bf16.mxu0 0
    %2412 = vmatpush1.bf16.msra.mxu0 %v2284
    %2413 = vmatprep.subr.bf16.mxu0 0
    %2414 = vmatpush1.bf16.msra.mxu0 %v2283
    %2415 = vmatprep.subr.bf16.mxu0 0
    %2416 = vmatpush1.bf16.msra.mxu0 %v2282
    %2417 = vmatprep.subr.bf16.mxu0 0
    %2418 = vmatpush1.bf16.msra.mxu0 %v2281
    %2419 = vmatprep.subr.bf16.mxu0 0
    %2420 = vmatpush1.bf16.msra.mxu0 %v2280
    %2421 = vmatprep.subr.bf16.mxu0 0
    %2422 = vmatpush1.bf16.msra.mxu0 %v2279
    %2423 = vmatprep.subr.bf16.mxu0 0
    %2424 = vmatpush2.bf16.msra.mxu0 0
    %2425 = vmatprep.subr.bf16.mxu0 0
    %2426 = vmatpush2.bf16.msra.mxu0 0
    %2427 = vmatprep.subr.bf16.mxu0 0
    %2428 = vmatpush2.bf16.msra.mxu0 0
    %2429 = vmatprep.subr.bf16.mxu0 0
    %2430 = vmatpush2.bf16.msra.mxu0 0
    %2431 = vmatprep.subr.bf16.mxu0 0
    %2432 = vmatpush2.bf16.msra.mxu0 0
    %2433 = vmatprep.subr.bf16.mxu0 0
    %2434 = vmatpush2.bf16.msra.mxu0 0
    %2435 = vmatprep.subr.bf16.mxu0 0
    %2436 = vmatpush2.bf16.msra.mxu0 0
    %2437 = vmatprep.subr.bf16.mxu0 0
    %2438 = vmatpush2.bf16.msra.mxu0 0
    %2439 = vmatprep.mubr.bf16.mxu0 0
    %2440 = vmatmul.mubr.bf16.gmra.mxu0 %v1999
    %v2441 = vpop.f32.mrf.mxu0
    %v2442 = vadd.f32 %v2402, %v2441
    %v2443 = vpop.f32.mrf.mxu0
    %v2444 = vpop.f32.mrf.mxu0
    %v2445 = vpop.f32.mrf.mxu0
    %2446 = vdwg.mxu0
    %2447 = vst [vmem:[#allocation13] sm:$0xff] %v2442
    // Predicated region
    $region62: #{tpu_custom_call.1} parent=1 // pred_check
      _
    $region63: #{tpu_custom_call.1} parent=1 // pred_check_branch
      %2449 = sbr.rel (0) target = $region65
    $region64: #{tpu_custom_call.1} parent=1 // pred_region
      %s2451 = ssub.s32 128, 128
      %2452 = vsyncadd [#allocation4], %s2451
      %s2454 = sshll.u32 [#allocation13], 4
      %s2455 = int_to_ptr.vmem [resolvable:$true] %s2454
      %2457 = dma.vmem_to_hbm [thread:$0]  %s2455, 128, %s9, [#allocation4]
    $region65: #{tpu_custom_call.1} parent=1 // pred_fallthru
      _
    // Predicated region
    $region66: #{tpu_custom_call.1} parent=1 // pred_check
      _
    $region67: #{tpu_custom_call.1} parent=1 // pred_check_branch
      %2459 = sbr.rel (0) target = $region69
    $region68: #{tpu_custom_call.1} parent=1 // pred_region
      %2460 = dma.done [#allocation4], 128
    $region69: #{tpu_custom_call.1} parent=1 // pred_fallthru
      _
    %2461 = vsyncpa [#allocation3], 1
    %2462 = vsyncpa [#allocation6], 1
    %2463 = vsyncpa [#allocation9], 1
    %2464 = vsyncpa [#allocation12], 1
    %2465 = vsyncpa [#allocation4], 1

</llo_original>
